<compile_context>
chip_gen: v7x
topology: tpu7x:2x2x1
jax: 0.10.0
libtpu: 0.0.40
codegen_flags: <defaults>
</compile_context>

<pallas_src>
import functools

import jax
import jax.numpy as jnp
from jax.experimental import pallas as pl
from jax.experimental.pallas import tpu as pltpu

_VMEM = pl.BlockSpec(memory_space=pltpu.MemorySpace.VMEM)
_HID_PAD = 128     # lane-dense padded feature width
_OUT_PAD = 128     # lane-dense padded final-Linear output width
_G_PAD = 8         # sublane-dense padded graph count


# ---------------------------------------------------------------------------
# Fused Pallas kernel:
#   one-hot embedding -> [GATConv (+ inter-layer ReLU)]*L -> mean-pool -> Linear
# ---------------------------------------------------------------------------
def _gnn_fused_kernel(xidx_ref, batch_ref, adj_ref, emb_ref, w_ref, asrc_ref,
                      adst_ref, bias_ref, lw_ref, lb_ref, o_ref, *,
                      num_layers, num_graphs_pad):
    n = adj_ref.shape[0]
    in_pad = emb_ref.shape[0]

    # --- Embedding lookup as one-hot matmul (folds the XLA gather) ----------
    col = jax.lax.broadcasted_iota(jnp.int32, (n, in_pad), 1)
    onehot = (col == xidx_ref[...]).astype(jnp.float32)               # [n, in_pad]
    h = jnp.dot(onehot, emb_ref[...],
                preferred_element_type=jnp.float32)                   # [n, 128]

    # --- Softmax additive mask hoisted out of the layer loop ----------------
    # (self-loops guarantee every row has at least one valid entry)
    mask_add = jnp.where(adj_ref[...] > 0.0, 0.0, -1e30)              # [n, n]

    for li in range(num_layers):                                      # static unroll
        # h' = lin(h)  (GATConv linear, no bias) — bf16 MXU, f32 accumulation.
        hw = jnp.dot(h.astype(jnp.bfloat16), w_ref[li],
                     preferred_element_type=jnp.float32)              # [n, 128]

        # Attention logits e[dst, src] = LeakyReLU(<hw[dst],a_dst> + <hw[src],a_src>)
        # dst projection on VPU+XLU (N=1 output is a waste of an MXU push);
        # src projection kept as a single skinny dot_general -> [1, n].
        d_col = jnp.sum(hw * adst_ref[li], axis=-1, keepdims=True)    # [n, 1]
        s_row = jax.lax.dot_general(asrc_ref[li], hw,
                                    (((1,), (1,)), ((), ())),
                                    preferred_element_type=jnp.float32)  # [1, n]
        e = d_col + s_row                                             # [n, n]
        e = jnp.where(e > 0, e, 0.2 * e)                              # LeakyReLU(0.2)

        # Masked softmax over incoming edges (additive mask, EUP reciprocal).
        e = e + mask_add
        e = e - jnp.max(e, axis=-1, keepdims=True)
        p = jnp.exp(e)
        attn = p * pl.reciprocal(jnp.sum(p, axis=-1, keepdims=True), approx=True)

        # out[dst] = sum_src attn[dst, src] * hw[src] + bias
        h = jnp.dot(attn.astype(jnp.bfloat16), hw.astype(jnp.bfloat16),
                    preferred_element_type=jnp.float32) + bias_ref[li]

        # ReLU only between GAT layers (none after the last, per the spec).
        if li + 1 < num_layers:
            h = jnp.maximum(h, 0.0)

    # --- global_mean_pool folded into the kernel -----------------------------
    row = jax.lax.broadcasted_iota(jnp.int32, (num_graphs_pad, n), 0)
    gsel = (row == batch_ref[...]).astype(jnp.float32)                # [G_pad, n]
    counts = jnp.maximum(jnp.sum(gsel, axis=-1, keepdims=True), 1.0)  # pad rows safe
    pool = gsel / counts
    pooled = jnp.dot(pool, h, preferred_element_type=jnp.float32)     # [G_pad, 128]

    # --- Final Linear, lane-dense padded output ------------------------------
    o_ref[...] = jnp.dot(pooled, lw_ref[...],
                         preferred_element_type=jnp.float32) + lb_ref[...]


def gnn_fused(x_idx2d, batch2d, adj, emb, w_all, asrc_all, adst_all, bias_all,
              lin_w, lin_b, *, num_layers, num_graphs_pad):
    kern = functools.partial(_gnn_fused_kernel, num_layers=num_layers,
                             num_graphs_pad=num_graphs_pad)
    return pl.pallas_call(
        kern,
        out_shape=jax.ShapeDtypeStruct((num_graphs_pad, _OUT_PAD), jnp.float32),
        in_specs=[_VMEM] * 10,
        out_specs=_VMEM,
    )(x_idx2d, batch2d, adj, emb, w_all, asrc_all, adst_all, bias_all,
      lin_w, lin_b)


# ---------------------------------------------------------------------------
# Parameters (zero-padded to lane-dense widths) + forward pass
# ---------------------------------------------------------------------------
def init_gnn_params(key, in_dim, out_dim, hid_dim, num_layers):
    hp = _HID_PAD
    in_pad = max(_HID_PAD, ((in_dim + 127) // 128) * 128)
    k_emb, k_lw, k_lb, key = jax.random.split(key, 4)
    scale = 1.0 / jnp.sqrt(jnp.float32(hid_dim))

    emb = jax.random.normal(k_emb, (in_dim, hid_dim), jnp.float32) * 0.1
    lin_w = jax.random.normal(k_lw, (hid_dim, out_dim), jnp.float32) * scale
    lin_b = jax.random.normal(k_lb, (1, out_dim), jnp.float32) * 0.1

    ws, asrcs, adsts, biases = [], [], [], []
    for _ in range(num_layers):
        key, kw, ks, kd, kb = jax.random.split(key, 5)
        w = jax.random.normal(kw, (hid_dim, hid_dim), jnp.float32) * scale
        a_src = jax.random.normal(ks, (1, hid_dim), jnp.float32) * 0.1
        a_dst = jax.random.normal(kd, (1, hid_dim), jnp.float32) * 0.1
        bias = jax.random.normal(kb, (1, hid_dim), jnp.float32) * 0.1
        ws.append(jnp.pad(w, ((0, hp - hid_dim), (0, hp - hid_dim))))
        asrcs.append(jnp.pad(a_src, ((0, 0), (0, hp - hid_dim))))
        adsts.append(jnp.pad(a_dst, ((0, 0), (0, hp - hid_dim))))
        biases.append(jnp.pad(bias, ((0, 0), (0, hp - hid_dim))))

    return {
        "emb": jnp.pad(emb, ((0, in_pad - in_dim), (0, hp - hid_dim))),   # [in_pad, 128]
        "w": jnp.stack(ws).astype(jnp.bfloat16),                          # [L, 128, 128] bf16
        "a_src": jnp.stack(asrcs),                                        # [L, 1, 128]
        "a_dst": jnp.stack(adsts),                                        # [L, 1, 128]
        "bias": jnp.stack(biases),                                        # [L, 1, 128]
        "lin_w": jnp.pad(lin_w, ((0, hp - hid_dim), (0, _OUT_PAD - out_dim))),  # [128, 128]
        "lin_b": jnp.pad(lin_b, ((0, 0), (0, _OUT_PAD - out_dim))),       # [1, 128]
    }


@functools.partial(jax.jit, static_argnames=("num_graphs", "out_dim"))
def gnn_forward(params, x_idx, edge_index, batch, *, num_graphs, out_dim):
    n = x_idx.shape[0]
    num_layers = params["w"].shape[0]
    g_pad = max(_G_PAD, ((num_graphs + 7) // 8) * 8)

    # Dense adjacency with self loops: adj[dst, src] = 1 iff edge src -> dst.
    src, dst = edge_index[0], edge_index[1]
    adj = jnp.zeros((n, n), jnp.float32).at[dst, src].set(1.0)
    adj = adj.at[jnp.arange(n), jnp.arange(n)].set(1.0)

    out_pad = gnn_fused(
        x_idx.astype(jnp.int32).reshape(n, 1),     # node -> vocab id (column vec)
        batch.astype(jnp.int32).reshape(1, n),     # node -> graph id (row vec)
        adj, params["emb"], params["w"], params["a_src"], params["a_dst"],
        params["bias"], params["lin_w"], params["lin_b"],
        num_layers=num_layers, num_graphs_pad=g_pad)

    return out_pad[:num_graphs, :out_dim]


# ---------------------------------------------------------------------------
if __name__ == "__main__":
    in_dim, out_dim, hid_dim, num_layers = 20, 3, 16, 3
    n, num_graphs = 16, 2

    key = jax.random.PRNGKey(0)
    k_x, k_p = jax.random.split(key)

    # Node feature indices for the Embedding layer (shape [n], ints in [0, in_dim)).
    x_idx = jax.random.randint(k_x, (n,), 0, in_dim, dtype=jnp.int32)

    # Two bidirectional ring graphs: nodes 0..7 (graph 0) and 8..15 (graph 1).
    edges = []
    for g0 in (0, 8):
        for i in range(8):
            a, b = g0 + i, g0 + (i + 1) % 8
            edges.append((a, b))
            edges.append((b, a))
    edge_index = jnp.array(edges, dtype=jnp.int32).T  # [2, num_edges]
    batch = jnp.array([0] * 8 + [1] * 8, dtype=jnp.int32)

    params = init_gnn_params(k_p, in_dim, out_dim, hid_dim, num_layers)
    out = gnn_forward(params, x_idx, edge_index, batch,
                      num_graphs=num_graphs, out_dim=out_dim)
    out = jax.block_until_ready(out)

    assert out.shape == (num_graphs, out_dim)
    assert out.dtype == jnp.float32
    assert bool(jnp.all(jnp.isfinite(out)))
    print("KERNEL_OK")
</pallas_src>

<mosaic_0001>
module attributes {stable_mosaic.version = 11 : i64} {
  func.func @_gnn_fused_kernel(%arg0: memref<16x1xi32, #tpu.memory_space<vmem>>, %arg1: memref<1x16xi32, #tpu.memory_space<vmem>>, %arg2: memref<16x16xf32, #tpu.memory_space<vmem>>, %arg3: memref<128x128xf32, #tpu.memory_space<vmem>>, %arg4: memref<3x128x128xbf16, #tpu.memory_space<vmem>>, %arg5: memref<3x1x128xf32, #tpu.memory_space<vmem>>, %arg6: memref<3x1x128xf32, #tpu.memory_space<vmem>>, %arg7: memref<3x1x128xf32, #tpu.memory_space<vmem>>, %arg8: memref<128x128xf32, #tpu.memory_space<vmem>>, %arg9: memref<1x128xf32, #tpu.memory_space<vmem>>, %arg10: memref<8x128xf32, #tpu.memory_space<vmem>>) attributes {dimension_semantics = [], scalar_prefetch = 0 : i64, scratch_operands = 0 : i64, tpu.core_type = #tpu.core_type<tc>} {
    %0 = tpu.iota {dimensions = array<i32: 1>} : vector<16x128xi32>
    %c0 = arith.constant 0 : index
    %c0_0 = arith.constant 0 : index
    %1 = vector.load %arg0[%c0, %c0_0] : memref<16x1xi32, #tpu.memory_space<vmem>>, vector<16x1xi32>
    %2 = vector.broadcast %1 : vector<16x1xi32> to vector<16x128xi32>
    %3 = arith.cmpi eq, %0, %2 : vector<16x128xi32>
    %4 = arith.extui %3 : vector<16x128xi1> to vector<16x128xi32>
    %5 = arith.sitofp %4 : vector<16x128xi32> to vector<16x128xf32>
    %c0_1 = arith.constant 0 : index
    %c0_2 = arith.constant 0 : index
    %6 = vector.load %arg3[%c0_1, %c0_2] : memref<128x128xf32, #tpu.memory_space<vmem>>, vector<128x128xf32>
    %cst = arith.constant dense<0.000000e+00> : vector<16x128xf32>
    %7 = tpu.matmul %5, %6, %cst {dimension_numbers = #tpu.dot_dimension_numbers<[1], [0], [0], [1], [0, 0, 1, 1], [], []>} : vector<16x128xf32>, vector<128x128xf32>, vector<16x128xf32> -> vector<16x128xf32>
    %c0_3 = arith.constant 0 : index
    %c0_4 = arith.constant 0 : index
    %8 = vector.load %arg2[%c0_3, %c0_4] : memref<16x16xf32, #tpu.memory_space<vmem>>, vector<16x16xf32>
    %cst_5 = arith.constant 0.000000e+00 : f32
    %9 = vector.broadcast %cst_5 : f32 to vector<16x16xf32>
    %10 = arith.cmpf ogt, %8, %9 : vector<16x16xf32>
    %cst_6 = arith.constant 0.000000e+00 : f32
    %cst_7 = arith.constant -1.000000e+30 : f32
    %11 = vector.broadcast %cst_6 : f32 to vector<16x16xf32>
    %12 = vector.broadcast %cst_7 : f32 to vector<16x16xf32>
    %13 = arith.select %10, %11, %12 : vector<16x16xi1>, vector<16x16xf32>
    %14 = arith.truncf %7 : vector<16x128xf32> to vector<16x128xbf16>
    %c0_8 = arith.constant 0 : index
    %c0_9 = arith.constant 0 : index
    %c0_10 = arith.constant 0 : index
    %15 = vector.load %arg4[%c0_8, %c0_9, %c0_10] : memref<3x128x128xbf16, #tpu.memory_space<vmem>>, vector<1x128x128xbf16>
    %16 = vector.shape_cast %15 : vector<1x128x128xbf16> to vector<128x128xbf16>
    %cst_11 = arith.constant dense<0.000000e+00> : vector<16x128xf32>
    %17 = tpu.matmul %14, %16, %cst_11 {dimension_numbers = #tpu.dot_dimension_numbers<[1], [0], [0], [1], [0, 0, 1, 1], [], []>} : vector<16x128xbf16>, vector<128x128xbf16>, vector<16x128xf32> -> vector<16x128xf32>
    %c0_12 = arith.constant 0 : index
    %c0_13 = arith.constant 0 : index
    %c0_14 = arith.constant 0 : index
    %18 = vector.load %arg6[%c0_12, %c0_13, %c0_14] : memref<3x1x128xf32, #tpu.memory_space<vmem>>, vector<1x1x128xf32>
    %19 = vector.shape_cast %18 : vector<1x1x128xf32> to vector<1x128xf32>
    %20 = vector.broadcast %19 : vector<1x128xf32> to vector<16x128xf32>
    %21 = arith.mulf %17, %20 : vector<16x128xf32>
    %cst_15 = arith.constant dense<0.000000e+00> : vector<16xf32>
    %22 = vector.multi_reduction <add>, %21, %cst_15 [1] : vector<16x128xf32> to vector<16xf32>
    %23 = vector.shape_cast %22 : vector<16xf32> to vector<16x1xf32>
    %c0_16 = arith.constant 0 : index
    %c0_17 = arith.constant 0 : index
    %c0_18 = arith.constant 0 : index
    %24 = vector.load %arg5[%c0_16, %c0_17, %c0_18] : memref<3x1x128xf32, #tpu.memory_space<vmem>>, vector<1x1x128xf32>
    %25 = vector.shape_cast %24 : vector<1x1x128xf32> to vector<1x128xf32>
    %cst_19 = arith.constant dense<0.000000e+00> : vector<1x16xf32>
    %26 = tpu.matmul %25, %17, %cst_19 {dimension_numbers = #tpu.dot_dimension_numbers<[1], [1], [0], [0], [0, 0, 1, 0], [], []>} : vector<1x128xf32>, vector<16x128xf32>, vector<1x16xf32> -> vector<1x16xf32>
    %27 = vector.broadcast %23 : vector<16x1xf32> to vector<16x16xf32>
    %28 = vector.broadcast %26 : vector<1x16xf32> to vector<16x16xf32>
    %29 = arith.addf %27, %28 : vector<16x16xf32>
    %cst_20 = arith.constant 0.000000e+00 : f32
    %30 = vector.broadcast %cst_20 : f32 to vector<16x16xf32>
    %31 = arith.cmpf ogt, %29, %30 : vector<16x16xf32>
    %cst_21 = arith.constant 2.000000e-01 : f32
    %32 = vector.broadcast %cst_21 : f32 to vector<16x16xf32>
    %33 = arith.mulf %32, %29 : vector<16x16xf32>
    %34 = arith.select %31, %29, %33 : vector<16x16xi1>, vector<16x16xf32>
    %35 = arith.addf %34, %13 : vector<16x16xf32>
    %cst_22 = arith.constant dense<0xFF800000> : vector<16xf32>
    %36 = vector.multi_reduction <maximumf>, %35, %cst_22 [1] : vector<16x16xf32> to vector<16xf32>
    %37 = vector.shape_cast %36 : vector<16xf32> to vector<16x1xf32>
    %38 = vector.broadcast %37 : vector<16x1xf32> to vector<16x16xf32>
    %39 = arith.subf %35, %38 : vector<16x16xf32>
    %40 = math.exp %39 : vector<16x16xf32>
    %cst_23 = arith.constant dense<0.000000e+00> : vector<16xf32>
    %41 = vector.multi_reduction <add>, %40, %cst_23 [1] : vector<16x16xf32> to vector<16xf32>
    %42 = vector.shape_cast %41 : vector<16xf32> to vector<16x1xf32>
    %43 = tpu.reciprocal %42 {approx = true} : vector<16x1xf32> -> vector<16x1xf32>
    %44 = vector.broadcast %43 : vector<16x1xf32> to vector<16x16xf32>
    %45 = arith.mulf %40, %44 : vector<16x16xf32>
    %46 = arith.truncf %45 : vector<16x16xf32> to vector<16x16xbf16>
    %47 = arith.truncf %17 : vector<16x128xf32> to vector<16x128xbf16>
    %cst_24 = arith.constant dense<0.000000e+00> : vector<16x128xf32>
    %48 = tpu.matmul %46, %47, %cst_24 {dimension_numbers = #tpu.dot_dimension_numbers<[1], [0], [0], [1], [0, 0, 1, 1], [], []>} : vector<16x16xbf16>, vector<16x128xbf16>, vector<16x128xf32> -> vector<16x128xf32>
    %c0_25 = arith.constant 0 : index
    %c0_26 = arith.constant 0 : index
    %c0_27 = arith.constant 0 : index
    %49 = vector.load %arg7[%c0_25, %c0_26, %c0_27] : memref<3x1x128xf32, #tpu.memory_space<vmem>>, vector<1x1x128xf32>
    %50 = vector.shape_cast %49 : vector<1x1x128xf32> to vector<1x128xf32>
    %51 = vector.broadcast %50 : vector<1x128xf32> to vector<16x128xf32>
    %52 = arith.addf %48, %51 : vector<16x128xf32>
    %cst_28 = arith.constant 0.000000e+00 : f32
    %53 = vector.broadcast %cst_28 : f32 to vector<16x128xf32>
    %54 = arith.maximumf %52, %53 : vector<16x128xf32>
    %55 = arith.truncf %54 : vector<16x128xf32> to vector<16x128xbf16>
    %c1 = arith.constant 1 : index
    %c0_29 = arith.constant 0 : index
    %c0_30 = arith.constant 0 : index
    %56 = vector.load %arg4[%c1, %c0_29, %c0_30] : memref<3x128x128xbf16, #tpu.memory_space<vmem>>, vector<1x128x128xbf16>
    %57 = vector.shape_cast %56 : vector<1x128x128xbf16> to vector<128x128xbf16>
    %cst_31 = arith.constant dense<0.000000e+00> : vector<16x128xf32>
    %58 = tpu.matmul %55, %57, %cst_31 {dimension_numbers = #tpu.dot_dimension_numbers<[1], [0], [0], [1], [0, 0, 1, 1], [], []>} : vector<16x128xbf16>, vector<128x128xbf16>, vector<16x128xf32> -> vector<16x128xf32>
    %c1_32 = arith.constant 1 : index
    %c0_33 = arith.constant 0 : index
    %c0_34 = arith.constant 0 : index
    %59 = vector.load %arg6[%c1_32, %c0_33, %c0_34] : memref<3x1x128xf32, #tpu.memory_space<vmem>>, vector<1x1x128xf32>
    %60 = vector.shape_cast %59 : vector<1x1x128xf32> to vector<1x128xf32>
    %61 = vector.broadcast %60 : vector<1x128xf32> to vector<16x128xf32>
    %62 = arith.mulf %58, %61 : vector<16x128xf32>
    %cst_35 = arith.constant dense<0.000000e+00> : vector<16xf32>
    %63 = vector.multi_reduction <add>, %62, %cst_35 [1] : vector<16x128xf32> to vector<16xf32>
    %64 = vector.shape_cast %63 : vector<16xf32> to vector<16x1xf32>
    %c1_36 = arith.constant 1 : index
    %c0_37 = arith.constant 0 : index
    %c0_38 = arith.constant 0 : index
    %65 = vector.load %arg5[%c1_36, %c0_37, %c0_38] : memref<3x1x128xf32, #tpu.memory_space<vmem>>, vector<1x1x128xf32>
    %66 = vector.shape_cast %65 : vector<1x1x128xf32> to vector<1x128xf32>
    %cst_39 = arith.constant dense<0.000000e+00> : vector<1x16xf32>
    %67 = tpu.matmul %66, %58, %cst_39 {dimension_numbers = #tpu.dot_dimension_numbers<[1], [1], [0], [0], [0, 0, 1, 0], [], []>} : vector<1x128xf32>, vector<16x128xf32>, vector<1x16xf32> -> vector<1x16xf32>
    %68 = vector.broadcast %64 : vector<16x1xf32> to vector<16x16xf32>
    %69 = vector.broadcast %67 : vector<1x16xf32> to vector<16x16xf32>
    %70 = arith.addf %68, %69 : vector<16x16xf32>
    %cst_40 = arith.constant 0.000000e+00 : f32
    %71 = vector.broadcast %cst_40 : f32 to vector<16x16xf32>
    %72 = arith.cmpf ogt, %70, %71 : vector<16x16xf32>
    %cst_41 = arith.constant 2.000000e-01 : f32
    %73 = vector.broadcast %cst_41 : f32 to vector<16x16xf32>
    %74 = arith.mulf %73, %70 : vector<16x16xf32>
    %75 = arith.select %72, %70, %74 : vector<16x16xi1>, vector<16x16xf32>
    %76 = arith.addf %75, %13 : vector<16x16xf32>
    %cst_42 = arith.constant dense<0xFF800000> : vector<16xf32>
    %77 = vector.multi_reduction <maximumf>, %76, %cst_42 [1] : vector<16x16xf32> to vector<16xf32>
    %78 = vector.shape_cast %77 : vector<16xf32> to vector<16x1xf32>
    %79 = vector.broadcast %78 : vector<16x1xf32> to vector<16x16xf32>
    %80 = arith.subf %76, %79 : vector<16x16xf32>
    %81 = math.exp %80 : vector<16x16xf32>
    %cst_43 = arith.constant dense<0.000000e+00> : vector<16xf32>
    %82 = vector.multi_reduction <add>, %81, %cst_43 [1] : vector<16x16xf32> to vector<16xf32>
    %83 = vector.shape_cast %82 : vector<16xf32> to vector<16x1xf32>
    %84 = tpu.reciprocal %83 {approx = true} : vector<16x1xf32> -> vector<16x1xf32>
    %85 = vector.broadcast %84 : vector<16x1xf32> to vector<16x16xf32>
    %86 = arith.mulf %81, %85 : vector<16x16xf32>
    %87 = arith.truncf %86 : vector<16x16xf32> to vector<16x16xbf16>
    %88 = arith.truncf %58 : vector<16x128xf32> to vector<16x128xbf16>
    %cst_44 = arith.constant dense<0.000000e+00> : vector<16x128xf32>
    %89 = tpu.matmul %87, %88, %cst_44 {dimension_numbers = #tpu.dot_dimension_numbers<[1], [0], [0], [1], [0, 0, 1, 1], [], []>} : vector<16x16xbf16>, vector<16x128xbf16>, vector<16x128xf32> -> vector<16x128xf32>
    %c1_45 = arith.constant 1 : index
    %c0_46 = arith.constant 0 : index
    %c0_47 = arith.constant 0 : index
    %90 = vector.load %arg7[%c1_45, %c0_46, %c0_47] : memref<3x1x128xf32, #tpu.memory_space<vmem>>, vector<1x1x128xf32>
    %91 = vector.shape_cast %90 : vector<1x1x128xf32> to vector<1x128xf32>
    %92 = vector.broadcast %91 : vector<1x128xf32> to vector<16x128xf32>
    %93 = arith.addf %89, %92 : vector<16x128xf32>
    %cst_48 = arith.constant 0.000000e+00 : f32
    %94 = vector.broadcast %cst_48 : f32 to vector<16x128xf32>
    %95 = arith.maximumf %93, %94 : vector<16x128xf32>
    %96 = arith.truncf %95 : vector<16x128xf32> to vector<16x128xbf16>
    %c2 = arith.constant 2 : index
    %c0_49 = arith.constant 0 : index
    %c0_50 = arith.constant 0 : index
    %97 = vector.load %arg4[%c2, %c0_49, %c0_50] : memref<3x128x128xbf16, #tpu.memory_space<vmem>>, vector<1x128x128xbf16>
    %98 = vector.shape_cast %97 : vector<1x128x128xbf16> to vector<128x128xbf16>
    %cst_51 = arith.constant dense<0.000000e+00> : vector<16x128xf32>
    %99 = tpu.matmul %96, %98, %cst_51 {dimension_numbers = #tpu.dot_dimension_numbers<[1], [0], [0], [1], [0, 0, 1, 1], [], []>} : vector<16x128xbf16>, vector<128x128xbf16>, vector<16x128xf32> -> vector<16x128xf32>
    %c2_52 = arith.constant 2 : index
    %c0_53 = arith.constant 0 : index
    %c0_54 = arith.constant 0 : index
    %100 = vector.load %arg6[%c2_52, %c0_53, %c0_54] : memref<3x1x128xf32, #tpu.memory_space<vmem>>, vector<1x1x128xf32>
    %101 = vector.shape_cast %100 : vector<1x1x128xf32> to vector<1x128xf32>
    %102 = vector.broadcast %101 : vector<1x128xf32> to vector<16x128xf32>
    %103 = arith.mulf %99, %102 : vector<16x128xf32>
    %cst_55 = arith.constant dense<0.000000e+00> : vector<16xf32>
    %104 = vector.multi_reduction <add>, %103, %cst_55 [1] : vector<16x128xf32> to vector<16xf32>
    %105 = vector.shape_cast %104 : vector<16xf32> to vector<16x1xf32>
    %c2_56 = arith.constant 2 : index
    %c0_57 = arith.constant 0 : index
    %c0_58 = arith.constant 0 : index
    %106 = vector.load %arg5[%c2_56, %c0_57, %c0_58] : memref<3x1x128xf32, #tpu.memory_space<vmem>>, vector<1x1x128xf32>
    %107 = vector.shape_cast %106 : vector<1x1x128xf32> to vector<1x128xf32>
    %cst_59 = arith.constant dense<0.000000e+00> : vector<1x16xf32>
    %108 = tpu.matmul %107, %99, %cst_59 {dimension_numbers = #tpu.dot_dimension_numbers<[1], [1], [0], [0], [0, 0, 1, 0], [], []>} : vector<1x128xf32>, vector<16x128xf32>, vector<1x16xf32> -> vector<1x16xf32>
    %109 = vector.broadcast %105 : vector<16x1xf32> to vector<16x16xf32>
    %110 = vector.broadcast %108 : vector<1x16xf32> to vector<16x16xf32>
    %111 = arith.addf %109, %110 : vector<16x16xf32>
    %cst_60 = arith.constant 0.000000e+00 : f32
    %112 = vector.broadcast %cst_60 : f32 to vector<16x16xf32>
    %113 = arith.cmpf ogt, %111, %112 : vector<16x16xf32>
    %cst_61 = arith.constant 2.000000e-01 : f32
    %114 = vector.broadcast %cst_61 : f32 to vector<16x16xf32>
    %115 = arith.mulf %114, %111 : vector<16x16xf32>
    %116 = arith.select %113, %111, %115 : vector<16x16xi1>, vector<16x16xf32>
    %117 = arith.addf %116, %13 : vector<16x16xf32>
    %cst_62 = arith.constant dense<0xFF800000> : vector<16xf32>
    %118 = vector.multi_reduction <maximumf>, %117, %cst_62 [1] : vector<16x16xf32> to vector<16xf32>
    %119 = vector.shape_cast %118 : vector<16xf32> to vector<16x1xf32>
    %120 = vector.broadcast %119 : vector<16x1xf32> to vector<16x16xf32>
    %121 = arith.subf %117, %120 : vector<16x16xf32>
    %122 = math.exp %121 : vector<16x16xf32>
    %cst_63 = arith.constant dense<0.000000e+00> : vector<16xf32>
    %123 = vector.multi_reduction <add>, %122, %cst_63 [1] : vector<16x16xf32> to vector<16xf32>
    %124 = vector.shape_cast %123 : vector<16xf32> to vector<16x1xf32>
    %125 = tpu.reciprocal %124 {approx = true} : vector<16x1xf32> -> vector<16x1xf32>
    %126 = vector.broadcast %125 : vector<16x1xf32> to vector<16x16xf32>
    %127 = arith.mulf %122, %126 : vector<16x16xf32>
    %128 = arith.truncf %127 : vector<16x16xf32> to vector<16x16xbf16>
    %129 = arith.truncf %99 : vector<16x128xf32> to vector<16x128xbf16>
    %cst_64 = arith.constant dense<0.000000e+00> : vector<16x128xf32>
    %130 = tpu.matmul %128, %129, %cst_64 {dimension_numbers = #tpu.dot_dimension_numbers<[1], [0], [0], [1], [0, 0, 1, 1], [], []>} : vector<16x16xbf16>, vector<16x128xbf16>, vector<16x128xf32> -> vector<16x128xf32>
    %c2_65 = arith.constant 2 : index
    %c0_66 = arith.constant 0 : index
    %c0_67 = arith.constant 0 : index
    %131 = vector.load %arg7[%c2_65, %c0_66, %c0_67] : memref<3x1x128xf32, #tpu.memory_space<vmem>>, vector<1x1x128xf32>
    %132 = vector.shape_cast %131 : vector<1x1x128xf32> to vector<1x128xf32>
    %133 = vector.broadcast %132 : vector<1x128xf32> to vector<16x128xf32>
    %134 = arith.addf %130, %133 : vector<16x128xf32>
    %135 = tpu.iota {dimensions = array<i32: 0>} : vector<8x16xi32>
    %c0_68 = arith.constant 0 : index
    %c0_69 = arith.constant 0 : index
    %136 = vector.load %arg1[%c0_68, %c0_69] : memref<1x16xi32, #tpu.memory_space<vmem>>, vector<1x16xi32>
    %137 = vector.broadcast %136 : vector<1x16xi32> to vector<8x16xi32>
    %138 = arith.cmpi eq, %135, %137 : vector<8x16xi32>
    %139 = arith.extui %138 : vector<8x16xi1> to vector<8x16xi32>
    %140 = arith.sitofp %139 : vector<8x16xi32> to vector<8x16xf32>
    %cst_70 = arith.constant dense<0.000000e+00> : vector<8xf32>
    %141 = vector.multi_reduction <add>, %140, %cst_70 [1] : vector<8x16xf32> to vector<8xf32>
    %142 = vector.shape_cast %141 : vector<8xf32> to vector<8x1xf32>
    %cst_71 = arith.constant 1.000000e+00 : f32
    %143 = vector.broadcast %cst_71 : f32 to vector<8x1xf32>
    %144 = arith.maximumf %142, %143 : vector<8x1xf32>
    %145 = vector.broadcast %144 : vector<8x1xf32> to vector<8x16xf32>
    %146 = arith.divf %140, %145 : vector<8x16xf32>
    %cst_72 = arith.constant dense<0.000000e+00> : vector<8x128xf32>
    %147 = tpu.matmul %146, %134, %cst_72 {dimension_numbers = #tpu.dot_dimension_numbers<[1], [0], [0], [1], [0, 0, 1, 1], [], []>} : vector<8x16xf32>, vector<16x128xf32>, vector<8x128xf32> -> vector<8x128xf32>
    %c0_73 = arith.constant 0 : index
    %c0_74 = arith.constant 0 : index
    %148 = vector.load %arg8[%c0_73, %c0_74] : memref<128x128xf32, #tpu.memory_space<vmem>>, vector<128x128xf32>
    %cst_75 = arith.constant dense<0.000000e+00> : vector<8x128xf32>
    %149 = tpu.matmul %147, %148, %cst_75 {dimension_numbers = #tpu.dot_dimension_numbers<[1], [0], [0], [1], [0, 0, 1, 1], [], []>} : vector<8x128xf32>, vector<128x128xf32>, vector<8x128xf32> -> vector<8x128xf32>
    %c0_76 = arith.constant 0 : index
    %c0_77 = arith.constant 0 : index
    %150 = vector.load %arg9[%c0_76, %c0_77] : memref<1x128xf32, #tpu.memory_space<vmem>>, vector<1x128xf32>
    %151 = vector.broadcast %150 : vector<1x128xf32> to vector<8x128xf32>
    %152 = arith.addf %149, %151 : vector<8x128xf32>
    %c0_78 = arith.constant 0 : index
    %c0_79 = arith.constant 0 : index
    %153 = vector.load %arg10[%c0_78, %c0_79] : memref<8x128xf32, #tpu.memory_space<vmem>>, vector<8x128xf32>
    tpu.vector_store %arg10[%c0_78, %c0_79], %152 {strides = array<i32>} : memref<8x128xf32, #tpu.memory_space<vmem>>, vector<8x128xf32>,
    return
  }
}

</mosaic_0001>

<llo_original>
// kernel: gnn_forward.1
$region0: #{gnn_forward.1}
  #allocation0 [shape = 'u32[]', space=smem, size = 0x4, offset = 0x4, fixed_abs, tag = 'smem constant byte address 0x4 - core index']
  #allocation1 [shape = 'u32[144,128]{1,0:T(1,128)}', space=vmem, size = 0x12000, scoped, tag = 'internal scratch']
  %s0 = inlined_call_operand.vmem [shape: s32[16,1], index: 0, kind: input, shape index: {}]
  %s1 = inlined_call_operand.vmem [shape: s32[1,16], index: 1, kind: input, shape index: {}]
  %s2 = inlined_call_operand.vmem [shape: f32[16,16], index: 2, kind: input, shape index: {}]
  %s3 = inlined_call_operand.vmem [shape: f32[128,128], index: 3, kind: input, shape index: {}]
  %s4 = inlined_call_operand.vmem [shape: bf16[3,128,128], index: 4, kind: input, shape index: {}]
  %s5 = inlined_call_operand.vmem [shape: f32[3,1,128], index: 5, kind: input, shape index: {}]
  %s6 = inlined_call_operand.vmem [shape: f32[3,1,128], index: 6, kind: input, shape index: {}]
  %s7 = inlined_call_operand.vmem [shape: f32[3,1,128], index: 7, kind: input, shape index: {}]
  %s8 = inlined_call_operand.vmem [shape: f32[128,128], index: 8, kind: input, shape index: {}]
  %s9 = inlined_call_operand.vmem [shape: f32[1,128], index: 9, kind: input, shape index: {}]
  %s10 = inlined_call_operand.vmem [shape: f32[8,128], index: 10, kind: output, shape index: {}]
  %s11 = sld [smem:[#allocation0]]
  $region50: #{gnn_forward.1} parent=0
    _
  %s13 = ssub.s32 1, %s11
  %s14 = scalar_select 0, %s13, %s11
  // Predicated region
  $region2: #{gnn_forward.1} parent=0 // pred_check
    _
  $region3: #{gnn_forward.1} parent=0 // pred_check_branch
    %16 = sbr.rel (0) target = $region5
  $region4: #{gnn_forward.1} parent=0 // pred_region
    _
  $region5: #{gnn_forward.1} parent=0 // pred_fallthru
    _
  // Predicated region
  $region6: #{gnn_forward.1} parent=0 // pred_check
    _
  $region7: #{gnn_forward.1} parent=0 // pred_check_branch
    %18 = sbr.rel (0) target = $region9
  $region8: #{gnn_forward.1} parent=0 // pred_region
    _
  $region9: #{gnn_forward.1} parent=0 // pred_fallthru
    _
  // Predicated region
  $region10: #{gnn_forward.1} parent=0 // pred_check
    _
  $region11: #{gnn_forward.1} parent=0 // pred_check_branch
    %20 = sbr.rel (0) target = $region13
  $region12: #{gnn_forward.1} parent=0 // pred_region
    _
  $region13: #{gnn_forward.1} parent=0 // pred_fallthru
    _
  // Predicated region
  $region14: #{gnn_forward.1} parent=0 // pred_check
    _
  $region15: #{gnn_forward.1} parent=0 // pred_check_branch
    %22 = sbr.rel (0) target = $region17
  $region16: #{gnn_forward.1} parent=0 // pred_region
    _
  $region17: #{gnn_forward.1} parent=0 // pred_fallthru
    _
  // Predicated region
  $region18: #{gnn_forward.1} parent=0 // pred_check
    _
  $region19: #{gnn_forward.1} parent=0 // pred_check_branch
    %24 = sbr.rel (0) target = $region21
  $region20: #{gnn_forward.1} parent=0 // pred_region
    _
  $region21: #{gnn_forward.1} parent=0 // pred_fallthru
    _
  // Predicated region
  $region22: #{gnn_forward.1} parent=0 // pred_check
    _
  $region23: #{gnn_forward.1} parent=0 // pred_check_branch
    %26 = sbr.rel (0) target = $region25
  $region24: #{gnn_forward.1} parent=0 // pred_region
    _
  $region25: #{gnn_forward.1} parent=0 // pred_fallthru
    _
  // Predicated region
  $region26: #{gnn_forward.1} parent=0 // pred_check
    _
  $region27: #{gnn_forward.1} parent=0 // pred_check_branch
    %28 = sbr.rel (0) target = $region29
  $region28: #{gnn_forward.1} parent=0 // pred_region
    _
  $region29: #{gnn_forward.1} parent=0 // pred_fallthru
    _
  // Predicated region
  $region30: #{gnn_forward.1} parent=0 // pred_check
    _
  $region31: #{gnn_forward.1} parent=0 // pred_check_branch
    %30 = sbr.rel (0) target = $region33
  $region32: #{gnn_forward.1} parent=0 // pred_region
    _
  $region33: #{gnn_forward.1} parent=0 // pred_fallthru
    _
  // Predicated region
  $region34: #{gnn_forward.1} parent=0 // pred_check
    _
  $region35: #{gnn_forward.1} parent=0 // pred_check_branch
    %32 = sbr.rel (0) target = $region37
  $region36: #{gnn_forward.1} parent=0 // pred_region
    _
  $region37: #{gnn_forward.1} parent=0 // pred_fallthru
    _
  // Predicated region
  $region38: #{gnn_forward.1} parent=0 // pred_check
    _
  $region39: #{gnn_forward.1} parent=0 // pred_check_branch
    %34 = sbr.rel (0) target = $region41
  $region40: #{gnn_forward.1} parent=0 // pred_region
    _
  $region41: #{gnn_forward.1} parent=0 // pred_fallthru
    _
  %v36 = vlaneseq
  %v37 = vand.u32 %v36, 127
  %v38 = vld [vmem:[%s0] sm:$0xff]
  %v39 = vld [vmem:[%s0 + $0x8] sm:$0xff]
  %40 = vset.pattern.permute.xlu0 0
  %41 = vperm.xlu0 %40, %v38
  %v42 = vpop.permute.xlu0 %41
  %43 = vset.pattern.permute.xlu0 0
  %44 = vperm.xlu0 %43, %v39
  %v45 = vpop.permute.xlu0 %44
  %vm46 = vcmp.eq.s32.totalorder %v37, %v42
  %vm47 = vcmp.eq.s32.totalorder %v37, %v45
  %v48 = vsel %vm46, 1, 0
  %v49 = vsel %vm47, 1, 0
  %v50 = vcvt.s32.f32 %v48
  %v51 = vcvt.s32.f32 %v49
  %v52 = vld [vmem:[%s3] sm:$0xff]
  %v53 = vld [vmem:[%s3 + $0x8] sm:$0xff]
  %v54 = vld [vmem:[%s3 + $0x10] sm:$0xff]
  %v55 = vld [vmem:[%s3 + $0x18] sm:$0xff]
  %v56 = vld [vmem:[%s3 + $0x20] sm:$0xff]
  %v57 = vld [vmem:[%s3 + $0x28] sm:$0xff]
  %v58 = vld [vmem:[%s3 + $0x30] sm:$0xff]
  %v59 = vld [vmem:[%s3 + $0x38] sm:$0xff]
  %v60 = vld [vmem:[%s3 + $0x40] sm:$0xff]
  %v61 = vld [vmem:[%s3 + $0x48] sm:$0xff]
  %v62 = vld [vmem:[%s3 + $0x50] sm:$0xff]
  %v63 = vld [vmem:[%s3 + $0x58] sm:$0xff]
  %v64 = vld [vmem:[%s3 + $0x60] sm:$0xff]
  %v65 = vld [vmem:[%s3 + $0x68] sm:$0xff]
  %v66 = vld [vmem:[%s3 + $0x70] sm:$0xff]
  %v67 = vld [vmem:[%s3 + $0x78] sm:$0xff]
  %68 = vmatprep.subr.mxu0 0.0
  %69 = vmatpush1.msra.mxu0 %v52
  %70 = vmatprep.subr.mxu0 0.0
  %71 = vmatpush1.msra.mxu0 %v53
  %72 = vmatprep.subr.mxu0 0.0
  %73 = vmatpush1.msra.mxu0 %v54
  %74 = vmatprep.subr.mxu0 0.0
  %75 = vmatpush1.msra.mxu0 %v55
  %76 = vmatprep.subr.mxu0 0.0
  %77 = vmatpush1.msra.mxu0 %v56
  %78 = vmatprep.subr.mxu0 0.0
  %79 = vmatpush1.msra.mxu0 %v57
  %80 = vmatprep.subr.mxu0 0.0
  %81 = vmatpush1.msra.mxu0 %v58
  %82 = vmatprep.subr.mxu0 0.0
  %83 = vmatpush1.msra.mxu0 %v59
  %84 = vmatprep.subr.mxu0 0.0
  %85 = vmatpush1.msra.mxu0 %v60
  %86 = vmatprep.subr.mxu0 0.0
  %87 = vmatpush1.msra.mxu0 %v61
  %88 = vmatprep.subr.mxu0 0.0
  %89 = vmatpush1.msra.mxu0 %v62
  %90 = vmatprep.subr.mxu0 0.0
  %91 = vmatpush1.msra.mxu0 %v63
  %92 = vmatprep.subr.mxu0 0.0
  %93 = vmatpush1.msra.mxu0 %v64
  %94 = vmatprep.subr.mxu0 0.0
  %95 = vmatpush1.msra.mxu0 %v65
  %96 = vmatprep.subr.mxu0 0.0
  %97 = vmatpush1.msra.mxu0 %v66
  %98 = vmatprep.subr.mxu0 0.0
  %99 = vmatpush1.msra.mxu0 %v67
  %100 = vmatprep.subr.mxu0 0.0
  %101 = vmatpush1.msra.mxu0 0.0
  %102 = vmatprep.subr.mxu0 0.0
  %103 = vmatpush1.msra.mxu0 0.0
  %104 = vmatprep.subr.mxu0 0.0
  %105 = vmatpush1.msra.mxu0 0.0
  %106 = vmatprep.subr.mxu0 0.0
  %107 = vmatpush1.msra.mxu0 0.0
  %108 = vmatprep.subr.mxu0 0.0
  %109 = vmatpush1.msra.mxu0 0.0
  %110 = vmatprep.subr.mxu0 0.0
  %111 = vmatpush1.msra.mxu0 0.0
  %112 = vmatprep.subr.mxu0 0.0
  %113 = vmatpush1.msra.mxu0 0.0
  %114 = vmatprep.subr.mxu0 0.0
  %115 = vmatpush1.msra.mxu0 0.0
  %116 = vmatprep.subr.mxu0 0.0
  %117 = vmatpush1.msra.mxu0 0.0
  %118 = vmatprep.subr.mxu0 0.0
  %119 = vmatpush1.msra.mxu0 0.0
  %120 = vmatprep.subr.mxu0 0.0
  %121 = vmatpush1.msra.mxu0 0.0
  %122 = vmatprep.subr.mxu0 0.0
  %123 = vmatpush1.msra.mxu0 0.0
  %124 = vmatprep.subr.mxu0 0.0
  %125 = vmatpush1.msra.mxu0 0.0
  %126 = vmatprep.subr.mxu0 0.0
  %127 = vmatpush1.msra.mxu0 0.0
  %128 = vmatprep.subr.mxu0 0.0
  %129 = vmatpush1.msra.mxu0 0.0
  %130 = vmatprep.subr.mxu0 0.0
  %131 = vmatpush1.msra.mxu0 0.0
  %132 = vmatprep.mubr.f32.mxu0 0.0
  %133 = vmatmul.mubr.f32.gmra.mrb[0].mxu0 %v50
  %v134 = vpop.f32.mrb[0].mxu0
  %v135 = vadd.f32 0.0, %v134
  %v136 = vpop.f32.mrb[0].mxu0
  %137 = vmatprep.mubr.f32.mxu0 0.0
  %138 = vmatmul.mubr.f32.gmra.mrb[0].mxu0 %v51
  %v139 = vpop.f32.mrb[0].mxu0
  %v140 = vadd.f32 0.0, %v139
  %v141 = vpop.f32.mrb[0].mxu0
  %142 = vdwg.mxu0
  %v143 = vld [vmem:[%s2] sm:$0xff]
  %v144 = vld [vmem:[%s2 + $0x8] sm:$0xff]
  %vm145 = vcmp.gt.f32.partialorder %v143, 0.0
  %vm146 = vcmp.gt.f32.partialorder %v144, 0.0
  %v147 = vsel %vm145, 0.0, -1e+30
  %v148 = vsel %vm146, 0.0, -1e+30
  %v149 = vpack.c.bf16 %v140, %v135
  %v150 = vld [vmem:[%s4] sm:$0xf]
  %v151 = vld [vmem:[%s4 + $0x4] sm:$0xf]
  %v152 = vld [vmem:[%s4 + $0x8] sm:$0xf]
  %v153 = vld [vmem:[%s4 + $0xc] sm:$0xf]
  %v154 = vld [vmem:[%s4 + $0x10] sm:$0xf]
  %v155 = vld [vmem:[%s4 + $0x14] sm:$0xf]
  %v156 = vld [vmem:[%s4 + $0x18] sm:$0xf]
  %v157 = vld [vmem:[%s4 + $0x1c] sm:$0xf]
  %v158 = vld [vmem:[%s4 + $0x20] sm:$0xf]
  %v159 = vld [vmem:[%s4 + $0x24] sm:$0xf]
  %v160 = vld [vmem:[%s4 + $0x28] sm:$0xf]
  %v161 = vld [vmem:[%s4 + $0x2c] sm:$0xf]
  %v162 = vld [vmem:[%s4 + $0x30] sm:$0xf]
  %v163 = vld [vmem:[%s4 + $0x34] sm:$0xf]
  %v164 = vld [vmem:[%s4 + $0x38] sm:$0xf]
  %v165 = vld [vmem:[%s4 + $0x3c] sm:$0xf]
  %v182 = vunpack.c.l.b16 %v150
  %v183 = vunpack.c.l.b16 %v151
  %v184 = vunpack.c.l.b16 %v152
  %v185 = vunpack.c.l.b16 %v153
  %v186 = vunpack.c.l.b16 %v154
  %v187 = vunpack.c.l.b16 %v155
  %v188 = vunpack.c.l.b16 %v156
  %v189 = vunpack.c.l.b16 %v157
  %v190 = vunpack.c.l.b16 %v158
  %v191 = vunpack.c.l.b16 %v159
  %v192 = vunpack.c.l.b16 %v160
  %v193 = vunpack.c.l.b16 %v161
  %v194 = vunpack.c.l.b16 %v162
  %v195 = vunpack.c.l.b16 %v163
  %v196 = vunpack.c.l.b16 %v164
  %v197 = vunpack.c.l.b16 %v165
  %v198 = vpack.c.b16 %v183, %v182
  %v199 = vpack.c.b16 %v185, %v184
  %v200 = vpack.c.b16 %v187, %v186
  %v201 = vpack.c.b16 %v189, %v188
  %v202 = vpack.c.b16 %v191, %v190
  %v203 = vpack.c.b16 %v193, %v192
  %v204 = vpack.c.b16 %v195, %v194
  %v205 = vpack.c.b16 %v197, %v196
  %214 = vmatprep.subr.bf16.mxu0 0
  %215 = vmatpush1.bf16.msra.mxu0 %v198
  %216 = vmatprep.subr.bf16.mxu0 0
  %217 = vmatpush1.bf16.msra.mxu0 %v199
  %218 = vmatprep.subr.bf16.mxu0 0
  %219 = vmatpush1.bf16.msra.mxu0 %v200
  %220 = vmatprep.subr.bf16.mxu0 0
  %221 = vmatpush1.bf16.msra.mxu0 %v201
  %222 = vmatprep.subr.bf16.mxu0 0
  %223 = vmatpush1.bf16.msra.mxu0 %v202
  %224 = vmatprep.subr.bf16.mxu0 0
  %225 = vmatpush1.bf16.msra.mxu0 %v203
  %226 = vmatprep.subr.bf16.mxu0 0
  %227 = vmatpush1.bf16.msra.mxu0 %v204
  %228 = vmatprep.subr.bf16.mxu0 0
  %229 = vmatpush1.bf16.msra.mxu0 %v205
  %230 = vmatprep.subr.bf16.mxu0 0
  %231 = vmatpush1.bf16.msra.mxu0 0
  %232 = vmatprep.subr.bf16.mxu0 0
  %233 = vmatpush1.bf16.msra.mxu0 0
  %234 = vmatprep.subr.bf16.mxu0 0
  %235 = vmatpush1.bf16.msra.mxu0 0
  %236 = vmatprep.subr.bf16.mxu0 0
  %237 = vmatpush1.bf16.msra.mxu0 0
  %238 = vmatprep.subr.bf16.mxu0 0
  %239 = vmatpush1.bf16.msra.mxu0 0
  %240 = vmatprep.subr.bf16.mxu0 0
  %241 = vmatpush1.bf16.msra.mxu0 0
  %242 = vmatprep.subr.bf16.mxu0 0
  %243 = vmatpush1.bf16.msra.mxu0 0
  %244 = vmatprep.subr.bf16.mxu0 0
  %245 = vmatpush1.bf16.msra.mxu0 0
  %246 = vmatprep.mubr.bf16.mxu0 0
  %247 = vmatmul.mubr.bf16.gmra.mrb[0].mxu0 %v149
  %v248 = vpop.f32.mrb[0].mxu0
  %v249 = vadd.f32 0.0, %v248
  %v250 = vpop.f32.mrb[0].mxu0
  %v251 = vpop.f32.mrb[0].mxu0
  %v252 = vadd.f32 0.0, %v251
  %v253 = vpop.f32.mrb[0].mxu0
  %254 = vdwg.mxu0
  %v255 = vld [vmem:[%s6] sm:$0x1]
  %v257 = vlaneseq
  %v258 = vshrl.u32 %v257, 7
  %v259 = vsub.s32 0, %v258
  %v260 = vrot.slane %v255, %v259
  %v262 = vmul.f32 %v249, %v260
  %v263 = vmul.f32 %v252, %v260
  %264 = vadd.xlane.f32.xlu0 %v262
  %v265 = vpop.xlane.xlu0 %264
  %266 = vadd.xlane.f32.xlu0 %v263
  %v267 = vpop.xlane.xlu0 %266
  %v268 = vld [vmem:[%s5] sm:$0x1]
  %269 = vmatprep.subr.mxu0 0.0
  %270 = vmatpush1.xpose.msra.mxu0 %v249
  %271 = vmatprep.subr.mxu0 0.0
  %272 = vmatpush1.xpose.msra.mxu0 %v252
  %273 = vmatprep.subr.mxu0 0.0
  %274 = vmatpush1.xpose.msra.mxu0 0.0
  %275 = vmatprep.subr.mxu0 0.0
  %276 = vmatpush1.xpose.msra.mxu0 0.0
  %277 = vmatprep.subr.mxu0 0.0
  %278 = vmatpush1.xpose.msra.mxu0 0.0
  %279 = vmatprep.subr.mxu0 0.0
  %280 = vmatpush1.xpose.msra.mxu0 0.0
  %281 = vmatprep.subr.mxu0 0.0
  %282 = vmatpush1.xpose.msra.mxu0 0.0
  %283 = vmatprep.subr.mxu0 0.0
  %284 = vmatpush1.xpose.msra.mxu0 0.0
  %285 = vmatprep.subr.mxu0 0.0
  %286 = vmatpush1.xpose.msra.mxu0 0.0
  %287 = vmatprep.subr.mxu0 0.0
  %288 = vmatpush1.xpose.msra.mxu0 0.0
  %289 = vmatprep.subr.mxu0 0.0
  %290 = vmatpush1.xpose.msra.mxu0 0.0
  %291 = vmatprep.subr.mxu0 0.0
  %292 = vmatpush1.xpose.msra.mxu0 0.0
  %293 = vmatprep.subr.mxu0 0.0
  %294 = vmatpush1.xpose.msra.mxu0 0.0
  %295 = vmatprep.subr.mxu0 0.0
  %296 = vmatpush1.xpose.msra.mxu0 0.0
  %297 = vmatprep.subr.mxu0 0.0
  %298 = vmatpush1.xpose.msra.mxu0 0.0
  %299 = vmatprep.subr.mxu0 0.0
  %300 = vmatpush1.xpose.msra.mxu0 0.0
  %301 = vmatprep.subr.mxu0 0.0
  %302 = vmatpush1.xpose.msra.mxu0 0.0
  %303 = vmatprep.subr.mxu0 0.0
  %304 = vmatpush1.xpose.msra.mxu0 0.0
  %305 = vmatprep.subr.mxu0 0.0
  %306 = vmatpush1.xpose.msra.mxu0 0.0
  %307 = vmatprep.subr.mxu0 0.0
  %308 = vmatpush1.xpose.msra.mxu0 0.0
  %309 = vmatprep.subr.mxu0 0.0
  %310 = vmatpush1.xpose.msra.mxu0 0.0
  %311 = vmatprep.subr.mxu0 0.0
  %312 = vmatpush1.xpose.msra.mxu0 0.0
  %313 = vmatprep.subr.mxu0 0.0
  %314 = vmatpush1.xpose.msra.mxu0 0.0
  %315 = vmatprep.subr.mxu0 0.0
  %316 = vmatpush1.xpose.msra.mxu0 0.0
  %317 = vmatprep.subr.mxu0 0.0
  %318 = vmatpush1.xpose.msra.mxu0 0.0
  %319 = vmatprep.subr.mxu0 0.0
  %320 = vmatpush1.xpose.msra.mxu0 0.0
  %321 = vmatprep.subr.mxu0 0.0
  %322 = vmatpush1.xpose.msra.mxu0 0.0
  %323 = vmatprep.subr.mxu0 0.0
  %324 = vmatpush1.xpose.msra.mxu0 0.0
  %325 = vmatprep.subr.mxu0 0.0
  %326 = vmatpush1.xpose.msra.mxu0 0.0
  %327 = vmatprep.subr.mxu0 0.0
  %328 = vmatpush1.xpose.msra.mxu0 0.0
  %329 = vmatprep.subr.mxu0 0.0
  %330 = vmatpush1.xpose.msra.mxu0 0.0
  %331 = vmatprep.subr.mxu0 0.0
  %332 = vmatpush1.xpose.msra.mxu0 0.0
  %333 = vmatprep.mubr.f32.mxu0 0.0
  %334 = vmatmul.mubr.f32.gmra.mrb[0].mxu0 %v268
  %v335 = vpop.f32.mrb[0].mxu0
  %v336 = vadd.f32 0.0, %v335
  %v337 = vpop.f32.mrb[0].mxu0
  %338 = vdwg.mxu0
  %v339 = vlaneseq
  %v340 = vshrl.u32 %v339, 7
  %v341 = vsub.s32 0, %v340
  %v342 = vrot.slane %v336, %v341
  %v343 = vadd.f32 %v265, %v342
  %v344 = vadd.f32 %v267, %v342
  %vm345 = vcmp.gt.f32.partialorder %v343, 0.0
  %vm346 = vcmp.gt.f32.partialorder %v344, 0.0
  %v347 = vmul.f32 %v343, 0.2
  %v348 = vmul.f32 %v344, 0.2
  %v349 = vsel %vm345, %v343, %v347
  %v350 = vsel %vm346, %v344, %v348
  %v351 = vadd.f32 %v349, %v147
  %v352 = vadd.f32 %v350, %v148
  %vm353 = vcmask 130048
  %v354 = vsel %vm353, %v351, -inf
  %355 = vmax.xlane.f32.xlu0 %v354
  %v356 = vpop.xlane.xlu0 %355
  %v357 = vsel %vm353, %v352, -inf
  %358 = vmax.xlane.f32.xlu0 %v357
  %v359 = vpop.xlane.xlu0 %358
  %v360 = vsub.f32 %v351, %v356
  %v361 = vsub.f32 %v352, %v359
  %v362 = vmul.f32 %v360, 1.442695
  %v363 = vpow.pop %v362
  %v364 = vmul.f32 %v361, 1.442695
  %v365 = vpow.pop %v364
  %v366 = vsel %vm353, %v363, 0.0
  %367 = vadd.xlane.f32.xlu0 %v366
  %v368 = vpop.xlane.xlu0 %367
  %v369 = vsel %vm353, %v365, 0.0
  %370 = vadd.xlane.f32.xlu0 %v369
  %v371 = vpop.xlane.xlu0 %370
  %v372 = vrcp.pop %v368
  %v373 = vrcp.pop %v371
  %v374 = vmul.f32 %v363, %v372
  %v375 = vmul.f32 %v365, %v373
  %v376 = vpack.c.bf16 %v375, %v374
  %v377 = vpack.c.bf16 %v252, %v249
  %v378 = vld [vmem:[%s7] sm:$0x1]
  %v380 = vlaneseq
  %v381 = vshrl.u32 %v380, 7
  %v382 = vsub.s32 0, %v381
  %v383 = vrot.slane %v378, %v382
  %v386 = vsel %vm353, %v376, 0
  %388 = vmatprep.subr.bf16.mxu0 0
  %389 = vmatpush1.bf16.msra.mxu0 %v377
  %390 = vmatprep.subr.bf16.mxu0 0
  %391 = vmatpush1.bf16.msra.mxu0 0
  %392 = vmatprep.subr.bf16.mxu0 0
  %393 = vmatpush1.bf16.msra.mxu0 0
  %394 = vmatprep.subr.bf16.mxu0 0
  %395 = vmatpush1.bf16.msra.mxu0 0
  %396 = vmatprep.subr.bf16.mxu0 0
  %397 = vmatpush1.bf16.msra.mxu0 0
  %398 = vmatprep.subr.bf16.mxu0 0
  %399 = vmatpush1.bf16.msra.mxu0 0
  %400 = vmatprep.subr.bf16.mxu0 0
  %401 = vmatpush1.bf16.msra.mxu0 0
  %402 = vmatprep.subr.bf16.mxu0 0
  %403 = vmatpush1.bf16.msra.mxu0 0
  %404 = vmatprep.subr.bf16.mxu0 0
  %405 = vmatpush1.bf16.msra.mxu0 0
  %406 = vmatprep.subr.bf16.mxu0 0
  %407 = vmatpush1.bf16.msra.mxu0 0
  %408 = vmatprep.subr.bf16.mxu0 0
  %409 = vmatpush1.bf16.msra.mxu0 0
  %410 = vmatprep.subr.bf16.mxu0 0
  %411 = vmatpush1.bf16.msra.mxu0 0
  %412 = vmatprep.subr.bf16.mxu0 0
  %413 = vmatpush1.bf16.msra.mxu0 0
  %414 = vmatprep.subr.bf16.mxu0 0
  %415 = vmatpush1.bf16.msra.mxu0 0
  %416 = vmatprep.subr.bf16.mxu0 0
  %417 = vmatpush1.bf16.msra.mxu0 0
  %418 = vmatprep.subr.bf16.mxu0 0
  %419 = vmatpush1.bf16.msra.mxu0 0
  %420 = vmatprep.mubr.bf16.mxu0 0
  %421 = vmatmul.mubr.bf16.gmra.mrb[0].mxu0 %v386
  %v422 = vpop.f32.mrb[0].mxu0
  %v423 = vadd.f32 %v383, %v422
  %v424 = vpop.f32.mrb[0].mxu0
  %v425 = vpop.f32.mrb[0].mxu0
  %v426 = vadd.f32 %v383, %v425
  %v427 = vpop.f32.mrb[0].mxu0
  %428 = vdwg.mxu0
  %v429 = vmax.f32 %v423, 0.0
  %v430 = vmax.f32 %v426, 0.0
  %v431 = vpack.c.bf16 %v430, %v429
  %s432 = scalar_lea.vmem %s4, 64
  %v433 = vld [vmem:[%s432] sm:$0xf]
  %v434 = vld [vmem:[%s432 + $0x4] sm:$0xf]
  %v435 = vld [vmem:[%s432 + $0x8] sm:$0xf]
  %v436 = vld [vmem:[%s432 + $0xc] sm:$0xf]
  %v437 = vld [vmem:[%s432 + $0x10] sm:$0xf]
  %v438 = vld [vmem:[%s432 + $0x14] sm:$0xf]
  %v439 = vld [vmem:[%s432 + $0x18] sm:$0xf]
  %v440 = vld [vmem:[%s432 + $0x1c] sm:$0xf]
  %v441 = vld [vmem:[%s432 + $0x20] sm:$0xf]
  %v442 = vld [vmem:[%s432 + $0x24] sm:$0xf]
  %v443 = vld [vmem:[%s432 + $0x28] sm:$0xf]
  %v444 = vld [vmem:[%s432 + $0x2c] sm:$0xf]
  %v445 = vld [vmem:[%s432 + $0x30] sm:$0xf]
  %v446 = vld [vmem:[%s432 + $0x34] sm:$0xf]
  %v447 = vld [vmem:[%s432 + $0x38] sm:$0xf]
  %v448 = vld [vmem:[%s432 + $0x3c] sm:$0xf]
  %v465 = vunpack.c.l.b16 %v433
  %v466 = vunpack.c.l.b16 %v434
  %v467 = vunpack.c.l.b16 %v435
  %v468 = vunpack.c.l.b16 %v436
  %v469 = vunpack.c.l.b16 %v437
  %v470 = vunpack.c.l.b16 %v438
  %v471 = vunpack.c.l.b16 %v439
  %v472 = vunpack.c.l.b16 %v440
  %v473 = vunpack.c.l.b16 %v441
  %v474 = vunpack.c.l.b16 %v442
  %v475 = vunpack.c.l.b16 %v443
  %v476 = vunpack.c.l.b16 %v444
  %v477 = vunpack.c.l.b16 %v445
  %v478 = vunpack.c.l.b16 %v446
  %v479 = vunpack.c.l.b16 %v447
  %v480 = vunpack.c.l.b16 %v448
  %v481 = vpack.c.b16 %v466, %v465
  %v482 = vpack.c.b16 %v468, %v467
  %v483 = vpack.c.b16 %v470, %v469
  %v484 = vpack.c.b16 %v472, %v471
  %v485 = vpack.c.b16 %v474, %v473
  %v486 = vpack.c.b16 %v476, %v475
  %v487 = vpack.c.b16 %v478, %v477
  %v488 = vpack.c.b16 %v480, %v479
  %497 = vmatprep.subr.bf16.mxu0 0
  %498 = vmatpush1.bf16.msra.mxu0 %v481
  %499 = vmatprep.subr.bf16.mxu0 0
  %500 = vmatpush1.bf16.msra.mxu0 %v482
  %501 = vmatprep.subr.bf16.mxu0 0
  %502 = vmatpush1.bf16.msra.mxu0 %v483
  %503 = vmatprep.subr.bf16.mxu0 0
  %504 = vmatpush1.bf16.msra.mxu0 %v484
  %505 = vmatprep.subr.bf16.mxu0 0
  %506 = vmatpush1.bf16.msra.mxu0 %v485
  %507 = vmatprep.subr.bf16.mxu0 0
  %508 = vmatpush1.bf16.msra.mxu0 %v486
  %509 = vmatprep.subr.bf16.mxu0 0
  %510 = vmatpush1.bf16.msra.mxu0 %v487
  %511 = vmatprep.subr.bf16.mxu0 0
  %512 = vmatpush1.bf16.msra.mxu0 %v488
  %513 = vmatprep.subr.bf16.mxu0 0
  %514 = vmatpush1.bf16.msra.mxu0 0
  %515 = vmatprep.subr.bf16.mxu0 0
  %516 = vmatpush1.bf16.msra.mxu0 0
  %517 = vmatprep.subr.bf16.mxu0 0
  %518 = vmatpush1.bf16.msra.mxu0 0
  %519 = vmatprep.subr.bf16.mxu0 0
  %520 = vmatpush1.bf16.msra.mxu0 0
  %521 = vmatprep.subr.bf16.mxu0 0
  %522 = vmatpush1.bf16.msra.mxu0 0
  %523 = vmatprep.subr.bf16.mxu0 0
  %524 = vmatpush1.bf16.msra.mxu0 0
  %525 = vmatprep.subr.bf16.mxu0 0
  %526 = vmatpush1.bf16.msra.mxu0 0
  %527 = vmatprep.subr.bf16.mxu0 0
  %528 = vmatpush1.bf16.msra.mxu0 0
  %529 = vmatprep.mubr.bf16.mxu0 0
  %530 = vmatmul.mubr.bf16.gmra.mrb[0].mxu0 %v431
  %v531 = vpop.f32.mrb[0].mxu0
  %v532 = vadd.f32 0.0, %v531
  %v533 = vpop.f32.mrb[0].mxu0
  %v534 = vpop.f32.mrb[0].mxu0
  %v535 = vadd.f32 0.0, %v534
  %v536 = vpop.f32.mrb[0].mxu0
  %537 = vdwg.mxu0
  %s538 = scalar_lea.vmem %s6, 1
  %v539 = vld [vmem:[%s538] sm:$0x1]
  %v541 = vlaneseq
  %v542 = vshrl.u32 %v541, 7
  %v543 = vsub.s32 0, %v542
  %v544 = vrot.slane %v539, %v543
  %v546 = vmul.f32 %v532, %v544
  %v547 = vmul.f32 %v535, %v544
  %548 = vadd.xlane.f32.xlu0 %v546
  %v549 = vpop.xlane.xlu0 %548
  %550 = vadd.xlane.f32.xlu0 %v547
  %v551 = vpop.xlane.xlu0 %550
  %s552 = scalar_lea.vmem %s5, 1
  %v553 = vld [vmem:[%s552] sm:$0x1]
  %554 = vmatprep.subr.mxu0 0.0
  %555 = vmatpush1.xpose.msra.mxu0 %v532
  %556 = vmatprep.subr.mxu0 0.0
  %557 = vmatpush1.xpose.msra.mxu0 %v535
  %558 = vmatprep.subr.mxu0 0.0
  %559 = vmatpush1.xpose.msra.mxu0 0.0
  %560 = vmatprep.subr.mxu0 0.0
  %561 = vmatpush1.xpose.msra.mxu0 0.0
  %562 = vmatprep.subr.mxu0 0.0
  %563 = vmatpush1.xpose.msra.mxu0 0.0
  %564 = vmatprep.subr.mxu0 0.0
  %565 = vmatpush1.xpose.msra.mxu0 0.0
  %566 = vmatprep.subr.mxu0 0.0
  %567 = vmatpush1.xpose.msra.mxu0 0.0
  %568 = vmatprep.subr.mxu0 0.0
  %569 = vmatpush1.xpose.msra.mxu0 0.0
  %570 = vmatprep.subr.mxu0 0.0
  %571 = vmatpush1.xpose.msra.mxu0 0.0
  %572 = vmatprep.subr.mxu0 0.0
  %573 = vmatpush1.xpose.msra.mxu0 0.0
  %574 = vmatprep.subr.mxu0 0.0
  %575 = vmatpush1.xpose.msra.mxu0 0.0
  %576 = vmatprep.subr.mxu0 0.0
  %577 = vmatpush1.xpose.msra.mxu0 0.0
  %578 = vmatprep.subr.mxu0 0.0
  %579 = vmatpush1.xpose.msra.mxu0 0.0
  %580 = vmatprep.subr.mxu0 0.0
  %581 = vmatpush1.xpose.msra.mxu0 0.0
  %582 = vmatprep.subr.mxu0 0.0
  %583 = vmatpush1.xpose.msra.mxu0 0.0
  %584 = vmatprep.subr.mxu0 0.0
  %585 = vmatpush1.xpose.msra.mxu0 0.0
  %586 = vmatprep.subr.mxu0 0.0
  %587 = vmatpush1.xpose.msra.mxu0 0.0
  %588 = vmatprep.subr.mxu0 0.0
  %589 = vmatpush1.xpose.msra.mxu0 0.0
  %590 = vmatprep.subr.mxu0 0.0
  %591 = vmatpush1.xpose.msra.mxu0 0.0
  %592 = vmatprep.subr.mxu0 0.0
  %593 = vmatpush1.xpose.msra.mxu0 0.0
  %594 = vmatprep.subr.mxu0 0.0
  %595 = vmatpush1.xpose.msra.mxu0 0.0
  %596 = vmatprep.subr.mxu0 0.0
  %597 = vmatpush1.xpose.msra.mxu0 0.0
  %598 = vmatprep.subr.mxu0 0.0
  %599 = vmatpush1.xpose.msra.mxu0 0.0
  %600 = vmatprep.subr.mxu0 0.0
  %601 = vmatpush1.xpose.msra.mxu0 0.0
  %602 = vmatprep.subr.mxu0 0.0
  %603 = vmatpush1.xpose.msra.mxu0 0.0
  %604 = vmatprep.subr.mxu0 0.0
  %605 = vmatpush1.xpose.msra.mxu0 0.0
  %606 = vmatprep.subr.mxu0 0.0
  %607 = vmatpush1.xpose.msra.mxu0 0.0
  %608 = vmatprep.subr.mxu0 0.0
  %609 = vmatpush1.xpose.msra.mxu0 0.0
  %610 = vmatprep.subr.mxu0 0.0
  %611 = vmatpush1.xpose.msra.mxu0 0.0
  %612 = vmatprep.subr.mxu0 0.0
  %613 = vmatpush1.xpose.msra.mxu0 0.0
  %614 = vmatprep.subr.mxu0 0.0
  %615 = vmatpush1.xpose.msra.mxu0 0.0
  %616 = vmatprep.subr.mxu0 0.0
  %617 = vmatpush1.xpose.msra.mxu0 0.0
  %618 = vmatprep.mubr.f32.mxu0 0.0
  %619 = vmatmul.mubr.f32.gmra.mrb[0].mxu0 %v553
  %v620 = vpop.f32.mrb[0].mxu0
  %v621 = vadd.f32 0.0, %v620
  %v622 = vpop.f32.mrb[0].mxu0
  %623 = vdwg.mxu0
  %v624 = vlaneseq
  %v625 = vshrl.u32 %v624, 7
  %v626 = vsub.s32 0, %v625
  %v627 = vrot.slane %v621, %v626
  %v628 = vadd.f32 %v549, %v627
  %v629 = vadd.f32 %v551, %v627
  %vm630 = vcmp.gt.f32.partialorder %v628, 0.0
  %vm631 = vcmp.gt.f32.partialorder %v629, 0.0
  %v632 = vmul.f32 %v628, 0.2
  %v633 = vmul.f32 %v629, 0.2
  %v634 = vsel %vm630, %v628, %v632
  %v635 = vsel %vm631, %v629, %v633
  %v636 = vadd.f32 %v634, %v147
  %v637 = vadd.f32 %v635, %v148
  %v638 = vsel %vm353, %v636, -inf
  %639 = vmax.xlane.f32.xlu0 %v638
  %v640 = vpop.xlane.xlu0 %639
  %v641 = vsel %vm353, %v637, -inf
  %642 = vmax.xlane.f32.xlu0 %v641
  %v643 = vpop.xlane.xlu0 %642
  %v644 = vsub.f32 %v636, %v640
  %v645 = vsub.f32 %v637, %v643
  %v646 = vmul.f32 %v644, 1.442695
  %v647 = vpow.pop %v646
  %v648 = vmul.f32 %v645, 1.442695
  %v649 = vpow.pop %v648
  %v650 = vsel %vm353, %v647, 0.0
  %651 = vadd.xlane.f32.xlu0 %v650
  %v652 = vpop.xlane.xlu0 %651
  %v653 = vsel %vm353, %v649, 0.0
  %654 = vadd.xlane.f32.xlu0 %v653
  %v655 = vpop.xlane.xlu0 %654
  %v656 = vrcp.pop %v652
  %v657 = vrcp.pop %v655
  %v658 = vmul.f32 %v647, %v656
  %v659 = vmul.f32 %v649, %v657
  %v660 = vpack.c.bf16 %v659, %v658
  %v661 = vpack.c.bf16 %v535, %v532
  %s662 = scalar_lea.vmem %s7, 1
  %v663 = vld [vmem:[%s662] sm:$0x1]
  %v665 = vlaneseq
  %v666 = vshrl.u32 %v665, 7
  %v667 = vsub.s32 0, %v666
  %v668 = vrot.slane %v663, %v667
  %v671 = vsel %vm353, %v660, 0
  %673 = vmatprep.subr.bf16.mxu0 0
  %674 = vmatpush1.bf16.msra.mxu0 %v661
  %675 = vmatprep.subr.bf16.mxu0 0
  %676 = vmatpush1.bf16.msra.mxu0 0
  %677 = vmatprep.subr.bf16.mxu0 0
  %678 = vmatpush1.bf16.msra.mxu0 0
  %679 = vmatprep.subr.bf16.mxu0 0
  %680 = vmatpush1.bf16.msra.mxu0 0
  %681 = vmatprep.subr.bf16.mxu0 0
  %682 = vmatpush1.bf16.msra.mxu0 0
  %683 = vmatprep.subr.bf16.mxu0 0
  %684 = vmatpush1.bf16.msra.mxu0 0
  %685 = vmatprep.subr.bf16.mxu0 0
  %686 = vmatpush1.bf16.msra.mxu0 0
  %687 = vmatprep.subr.bf16.mxu0 0
  %688 = vmatpush1.bf16.msra.mxu0 0
  %689 = vmatprep.subr.bf16.mxu0 0
  %690 = vmatpush1.bf16.msra.mxu0 0
  %691 = vmatprep.subr.bf16.mxu0 0
  %692 = vmatpush1.bf16.msra.mxu0 0
  %693 = vmatprep.subr.bf16.mxu0 0
  %694 = vmatpush1.bf16.msra.mxu0 0
  %695 = vmatprep.subr.bf16.mxu0 0
  %696 = vmatpush1.bf16.msra.mxu0 0
  %697 = vmatprep.subr.bf16.mxu0 0
  %698 = vmatpush1.bf16.msra.mxu0 0
  %699 = vmatprep.subr.bf16.mxu0 0
  %700 = vmatpush1.bf16.msra.mxu0 0
  %701 = vmatprep.subr.bf16.mxu0 0
  %702 = vmatpush1.bf16.msra.mxu0 0
  %703 = vmatprep.subr.bf16.mxu0 0
  %704 = vmatpush1.bf16.msra.mxu0 0
  %705 = vmatprep.mubr.bf16.mxu0 0
  %706 = vmatmul.mubr.bf16.gmra.mrb[0].mxu0 %v671
  %v707 = vpop.f32.mrb[0].mxu0
  %v708 = vadd.f32 %v668, %v707
  %v709 = vpop.f32.mrb[0].mxu0
  %v710 = vpop.f32.mrb[0].mxu0
  %v711 = vadd.f32 %v668, %v710
  %v712 = vpop.f32.mrb[0].mxu0
  %713 = vdwg.mxu0
  %v714 = vmax.f32 %v708, 0.0
  %v715 = vmax.f32 %v711, 0.0
  %v716 = vpack.c.bf16 %v715, %v714
  %s717 = scalar_lea.vmem %s4, 128
  %v718 = vld [vmem:[%s717] sm:$0xf]
  %v719 = vld [vmem:[%s717 + $0x4] sm:$0xf]
  %v720 = vld [vmem:[%s717 + $0x8] sm:$0xf]
  %v721 = vld [vmem:[%s717 + $0xc] sm:$0xf]
  %v722 = vld [vmem:[%s717 + $0x10] sm:$0xf]
  %v723 = vld [vmem:[%s717 + $0x14] sm:$0xf]
  %v724 = vld [vmem:[%s717 + $0x18] sm:$0xf]
  %v725 = vld [vmem:[%s717 + $0x1c] sm:$0xf]
  %v726 = vld [vmem:[%s717 + $0x20] sm:$0xf]
  %v727 = vld [vmem:[%s717 + $0x24] sm:$0xf]
  %v728 = vld [vmem:[%s717 + $0x28] sm:$0xf]
  %v729 = vld [vmem:[%s717 + $0x2c] sm:$0xf]
  %v730 = vld [vmem:[%s717 + $0x30] sm:$0xf]
  %v731 = vld [vmem:[%s717 + $0x34] sm:$0xf]
  %v732 = vld [vmem:[%s717 + $0x38] sm:$0xf]
  %v733 = vld [vmem:[%s717 + $0x3c] sm:$0xf]
  %v750 = vunpack.c.l.b16 %v718
  %v751 = vunpack.c.l.b16 %v719
  %v752 = vunpack.c.l.b16 %v720
  %v753 = vunpack.c.l.b16 %v721
  %v754 = vunpack.c.l.b16 %v722
  %v755 = vunpack.c.l.b16 %v723
  %v756 = vunpack.c.l.b16 %v724
  %v757 = vunpack.c.l.b16 %v725
  %v758 = vunpack.c.l.b16 %v726
  %v759 = vunpack.c.l.b16 %v727
  %v760 = vunpack.c.l.b16 %v728
  %v761 = vunpack.c.l.b16 %v729
  %v762 = vunpack.c.l.b16 %v730
  %v763 = vunpack.c.l.b16 %v731
  %v764 = vunpack.c.l.b16 %v732
  %v765 = vunpack.c.l.b16 %v733
  %v766 = vpack.c.b16 %v751, %v750
  %v767 = vpack.c.b16 %v753, %v752
  %v768 = vpack.c.b16 %v755, %v754
  %v769 = vpack.c.b16 %v757, %v756
  %v770 = vpack.c.b16 %v759, %v758
  %v771 = vpack.c.b16 %v761, %v760
  %v772 = vpack.c.b16 %v763, %v762
  %v773 = vpack.c.b16 %v765, %v764
  %782 = vmatprep.subr.bf16.mxu0 0
  %783 = vmatpush1.bf16.msra.mxu0 %v766
  %784 = vmatprep.subr.bf16.mxu0 0
  %785 = vmatpush1.bf16.msra.mxu0 %v767
  %786 = vmatprep.subr.bf16.mxu0 0
  %787 = vmatpush1.bf16.msra.mxu0 %v768
  %788 = vmatprep.subr.bf16.mxu0 0
  %789 = vmatpush1.bf16.msra.mxu0 %v769
  %790 = vmatprep.subr.bf16.mxu0 0
  %791 = vmatpush1.bf16.msra.mxu0 %v770
  %792 = vmatprep.subr.bf16.mxu0 0
  %793 = vmatpush1.bf16.msra.mxu0 %v771
  %794 = vmatprep.subr.bf16.mxu0 0
  %795 = vmatpush1.bf16.msra.mxu0 %v772
  %796 = vmatprep.subr.bf16.mxu0 0
  %797 = vmatpush1.bf16.msra.mxu0 %v773
  %798 = vmatprep.subr.bf16.mxu0 0
  %799 = vmatpush1.bf16.msra.mxu0 0
  %800 = vmatprep.subr.bf16.mxu0 0
  %801 = vmatpush1.bf16.msra.mxu0 0
  %802 = vmatprep.subr.bf16.mxu0 0
  %803 = vmatpush1.bf16.msra.mxu0 0
  %804 = vmatprep.subr.bf16.mxu0 0
  %805 = vmatpush1.bf16.msra.mxu0 0
  %806 = vmatprep.subr.bf16.mxu0 0
  %807 = vmatpush1.bf16.msra.mxu0 0
  %808 = vmatprep.subr.bf16.mxu0 0
  %809 = vmatpush1.bf16.msra.mxu0 0
  %810 = vmatprep.subr.bf16.mxu0 0
  %811 = vmatpush1.bf16.msra.mxu0 0
  %812 = vmatprep.subr.bf16.mxu0 0
  %813 = vmatpush1.bf16.msra.mxu0 0
  %814 = vmatprep.mubr.bf16.mxu0 0
  %815 = vmatmul.mubr.bf16.gmra.mrb[0].mxu0 %v716
  %v816 = vpop.f32.mrb[0].mxu0
  %v817 = vadd.f32 0.0, %v816
  %v818 = vpop.f32.mrb[0].mxu0
  %v819 = vpop.f32.mrb[0].mxu0
  %v820 = vadd.f32 0.0, %v819
  %v821 = vpop.f32.mrb[0].mxu0
  %822 = vdwg.mxu0
  %s823 = scalar_lea.vmem %s6, 2
  %v824 = vld [vmem:[%s823] sm:$0x1]
  %v826 = vlaneseq
  %v827 = vshrl.u32 %v826, 7
  %v828 = vsub.s32 0, %v827
  %v829 = vrot.slane %v824, %v828
  %v831 = vmul.f32 %v817, %v829
  %v832 = vmul.f32 %v820, %v829
  %833 = vadd.xlane.f32.xlu0 %v831
  %v834 = vpop.xlane.xlu0 %833
  %835 = vadd.xlane.f32.xlu0 %v832
  %v836 = vpop.xlane.xlu0 %835
  %s837 = scalar_lea.vmem %s5, 2
  %v838 = vld [vmem:[%s837] sm:$0x1]
  %839 = vmatprep.subr.mxu0 0.0
  %840 = vmatpush1.xpose.msra.mxu0 %v817
  %841 = vmatprep.subr.mxu0 0.0
  %842 = vmatpush1.xpose.msra.mxu0 %v820
  %843 = vmatprep.subr.mxu0 0.0
  %844 = vmatpush1.xpose.msra.mxu0 0.0
  %845 = vmatprep.subr.mxu0 0.0
  %846 = vmatpush1.xpose.msra.mxu0 0.0
  %847 = vmatprep.subr.mxu0 0.0
  %848 = vmatpush1.xpose.msra.mxu0 0.0
  %849 = vmatprep.subr.mxu0 0.0
  %850 = vmatpush1.xpose.msra.mxu0 0.0
  %851 = vmatprep.subr.mxu0 0.0
  %852 = vmatpush1.xpose.msra.mxu0 0.0
  %853 = vmatprep.subr.mxu0 0.0
  %854 = vmatpush1.xpose.msra.mxu0 0.0
  %855 = vmatprep.subr.mxu0 0.0
  %856 = vmatpush1.xpose.msra.mxu0 0.0
  %857 = vmatprep.subr.mxu0 0.0
  %858 = vmatpush1.xpose.msra.mxu0 0.0
  %859 = vmatprep.subr.mxu0 0.0
  %860 = vmatpush1.xpose.msra.mxu0 0.0
  %861 = vmatprep.subr.mxu0 0.0
  %862 = vmatpush1.xpose.msra.mxu0 0.0
  %863 = vmatprep.subr.mxu0 0.0
  %864 = vmatpush1.xpose.msra.mxu0 0.0
  %865 = vmatprep.subr.mxu0 0.0
  %866 = vmatpush1.xpose.msra.mxu0 0.0
  %867 = vmatprep.subr.mxu0 0.0
  %868 = vmatpush1.xpose.msra.mxu0 0.0
  %869 = vmatprep.subr.mxu0 0.0
  %870 = vmatpush1.xpose.msra.mxu0 0.0
  %871 = vmatprep.subr.mxu0 0.0
  %872 = vmatpush1.xpose.msra.mxu0 0.0
  %873 = vmatprep.subr.mxu0 0.0
  %874 = vmatpush1.xpose.msra.mxu0 0.0
  %875 = vmatprep.subr.mxu0 0.0
  %876 = vmatpush1.xpose.msra.mxu0 0.0
  %877 = vmatprep.subr.mxu0 0.0
  %878 = vmatpush1.xpose.msra.mxu0 0.0
  %879 = vmatprep.subr.mxu0 0.0
  %880 = vmatpush1.xpose.msra.mxu0 0.0
  %881 = vmatprep.subr.mxu0 0.0
  %882 = vmatpush1.xpose.msra.mxu0 0.0
  %883 = vmatprep.subr.mxu0 0.0
  %884 = vmatpush1.xpose.msra.mxu0 0.0
  %885 = vmatprep.subr.mxu0 0.0
  %886 = vmatpush1.xpose.msra.mxu0 0.0
  %887 = vmatprep.subr.mxu0 0.0
  %888 = vmatpush1.xpose.msra.mxu0 0.0
  %889 = vmatprep.subr.mxu0 0.0
  %890 = vmatpush1.xpose.msra.mxu0 0.0
  %891 = vmatprep.subr.mxu0 0.0
  %892 = vmatpush1.xpose.msra.mxu0 0.0
  %893 = vmatprep.subr.mxu0 0.0
  %894 = vmatpush1.xpose.msra.mxu0 0.0
  %895 = vmatprep.subr.mxu0 0.0
  %896 = vmatpush1.xpose.msra.mxu0 0.0
  %897 = vmatprep.subr.mxu0 0.0
  %898 = vmatpush1.xpose.msra.mxu0 0.0
  %899 = vmatprep.subr.mxu0 0.0
  %900 = vmatpush1.xpose.msra.mxu0 0.0
  %901 = vmatprep.subr.mxu0 0.0
  %902 = vmatpush1.xpose.msra.mxu0 0.0
  %903 = vmatprep.mubr.f32.mxu0 0.0
  %904 = vmatmul.mubr.f32.gmra.mrb[0].mxu0 %v838
  %v905 = vpop.f32.mrb[0].mxu0
  %v906 = vadd.f32 0.0, %v905
  %v907 = vpop.f32.mrb[0].mxu0
  %908 = vdwg.mxu0
  %v909 = vlaneseq
  %v910 = vshrl.u32 %v909, 7
  %v911 = vsub.s32 0, %v910
  %v912 = vrot.slane %v906, %v911
  %v913 = vadd.f32 %v834, %v912
  %v914 = vadd.f32 %v836, %v912
  %vm915 = vcmp.gt.f32.partialorder %v913, 0.0
  %vm916 = vcmp.gt.f32.partialorder %v914, 0.0
  %v917 = vmul.f32 %v913, 0.2
  %v918 = vmul.f32 %v914, 0.2
  %v919 = vsel %vm915, %v913, %v917
  %v920 = vsel %vm916, %v914, %v918
  %v921 = vadd.f32 %v919, %v147
  %v922 = vadd.f32 %v920, %v148
  %v923 = vsel %vm353, %v921, -inf
  %924 = vmax.xlane.f32.xlu0 %v923
  %v925 = vpop.xlane.xlu0 %924
  %v926 = vsel %vm353, %v922, -inf
  %927 = vmax.xlane.f32.xlu0 %v926
  %v928 = vpop.xlane.xlu0 %927
  %v929 = vsub.f32 %v921, %v925
  %v930 = vsub.f32 %v922, %v928
  %v931 = vmul.f32 %v929, 1.442695
  %v932 = vpow.pop %v931
  %v933 = vmul.f32 %v930, 1.442695
  %v934 = vpow.pop %v933
  %v935 = vsel %vm353, %v932, 0.0
  %936 = vadd.xlane.f32.xlu0 %v935
  %v937 = vpop.xlane.xlu0 %936
  %v938 = vsel %vm353, %v934, 0.0
  %939 = vadd.xlane.f32.xlu0 %v938
  %v940 = vpop.xlane.xlu0 %939
  %v941 = vrcp.pop %v937
  %v942 = vrcp.pop %v940
  %v943 = vmul.f32 %v932, %v941
  %v944 = vmul.f32 %v934, %v942
  %v945 = vpack.c.bf16 %v944, %v943
  %v946 = vpack.c.bf16 %v820, %v817
  %s947 = scalar_lea.vmem %s7, 2
  %v948 = vld [vmem:[%s947] sm:$0x1]
  %v950 = vlaneseq
  %v951 = vshrl.u32 %v950, 7
  %v952 = vsub.s32 0, %v951
  %v953 = vrot.slane %v948, %v952
  %v956 = vsel %vm353, %v945, 0
  %958 = vmatprep.subr.bf16.mxu0 0
  %959 = vmatpush1.bf16.msra.mxu0 %v946
  %960 = vmatprep.subr.bf16.mxu0 0
  %961 = vmatpush1.bf16.msra.mxu0 0
  %962 = vmatprep.subr.bf16.mxu0 0
  %963 = vmatpush1.bf16.msra.mxu0 0
  %964 = vmatprep.subr.bf16.mxu0 0
  %965 = vmatpush1.bf16.msra.mxu0 0
  %966 = vmatprep.subr.bf16.mxu0 0
  %967 = vmatpush1.bf16.msra.mxu0 0
  %968 = vmatprep.subr.bf16.mxu0 0
  %969 = vmatpush1.bf16.msra.mxu0 0
  %970 = vmatprep.subr.bf16.mxu0 0
  %971 = vmatpush1.bf16.msra.mxu0 0
  %972 = vmatprep.subr.bf16.mxu0 0
  %973 = vmatpush1.bf16.msra.mxu0 0
  %974 = vmatprep.subr.bf16.mxu0 0
  %975 = vmatpush1.bf16.msra.mxu0 0
  %976 = vmatprep.subr.bf16.mxu0 0
  %977 = vmatpush1.bf16.msra.mxu0 0
  %978 = vmatprep.subr.bf16.mxu0 0
  %979 = vmatpush1.bf16.msra.mxu0 0
  %980 = vmatprep.subr.bf16.mxu0 0
  %981 = vmatpush1.bf16.msra.mxu0 0
  %982 = vmatprep.subr.bf16.mxu0 0
  %983 = vmatpush1.bf16.msra.mxu0 0
  %984 = vmatprep.subr.bf16.mxu0 0
  %985 = vmatpush1.bf16.msra.mxu0 0
  %986 = vmatprep.subr.bf16.mxu0 0
  %987 = vmatpush1.bf16.msra.mxu0 0
  %988 = vmatprep.subr.bf16.mxu0 0
  %989 = vmatpush1.bf16.msra.mxu0 0
  %990 = vmatprep.mubr.bf16.mxu0 0
  %991 = vmatmul.mubr.bf16.gmra.mrb[0].mxu0 %v956
  %v992 = vpop.f32.mrb[0].mxu0
  %v993 = vadd.f32 %v953, %v992
  %v994 = vpop.f32.mrb[0].mxu0
  %v995 = vpop.f32.mrb[0].mxu0
  %v996 = vadd.f32 %v953, %v995
  %v997 = vpop.f32.mrb[0].mxu0
  %998 = vdwg.mxu0
  %v999 = vlaneseq
  %v1000 = vshrl.u32 %v999, 7
  %v1001 = vld [vmem:[%s1] sm:$0x1]
  %v1002 = vlaneseq
  %v1003 = vshrl.u32 %v1002, 7
  %v1004 = vsub.s32 0, %v1003
  %v1005 = vrot.slane %v1001, %v1004
  %vm1006 = vcmp.eq.s32.totalorder %v1000, %v1005
  %v1007 = vsel %vm1006, 1, 0
  %v1008 = vcvt.s32.f32 %v1007
  %v1009 = vsel %vm353, %v1008, 0.0
  %1010 = vadd.xlane.f32.xlu0 %v1009
  %v1011 = vpop.xlane.xlu0 %1010
  %v1012 = vmax.f32 %v1011, 1.0
  %v1013 = vrcp.pop %v1012
  %v1014 = vmul.f32 %v1008, %v1013
  %v1016 = vsel %vm353, %v1014, 0
  %1018 = vmatprep.subr.mxu0 0.0
  %1019 = vmatpush1.msra.mxu0 %v993
  %1020 = vmatprep.subr.mxu0 0.0
  %1021 = vmatpush1.msra.mxu0 %v996
  %1022 = vmatprep.subr.mxu0 0.0
  %1023 = vmatpush1.msra.mxu0 0.0
  %1024 = vmatprep.subr.mxu0 0.0
  %1025 = vmatpush1.msra.mxu0 0.0
  %1026 = vmatprep.subr.mxu0 0.0
  %1027 = vmatpush1.msra.mxu0 0.0
  %1028 = vmatprep.subr.mxu0 0.0
  %1029 = vmatpush1.msra.mxu0 0.0
  %1030 = vmatprep.subr.mxu0 0.0
  %1031 = vmatpush1.msra.mxu0 0.0
  %1032 = vmatprep.subr.mxu0 0.0
  %1033 = vmatpush1.msra.mxu0 0.0
  %1034 = vmatprep.subr.mxu0 0.0
  %1035 = vmatpush1.msra.mxu0 0.0
  %1036 = vmatprep.subr.mxu0 0.0
  %1037 = vmatpush1.msra.mxu0 0.0
  %1038 = vmatprep.subr.mxu0 0.0
  %1039 = vmatpush1.msra.mxu0 0.0
  %1040 = vmatprep.subr.mxu0 0.0
  %1041 = vmatpush1.msra.mxu0 0.0
  %1042 = vmatprep.subr.mxu0 0.0
  %1043 = vmatpush1.msra.mxu0 0.0
  %1044 = vmatprep.subr.mxu0 0.0
  %1045 = vmatpush1.msra.mxu0 0.0
  %1046 = vmatprep.subr.mxu0 0.0
  %1047 = vmatpush1.msra.mxu0 0.0
  %1048 = vmatprep.subr.mxu0 0.0
  %1049 = vmatpush1.msra.mxu0 0.0
  %1050 = vmatprep.subr.mxu0 0.0
  %1051 = vmatpush1.msra.mxu0 0.0
  %1052 = vmatprep.subr.mxu0 0.0
  %1053 = vmatpush1.msra.mxu0 0.0
  %1054 = vmatprep.subr.mxu0 0.0
  %1055 = vmatpush1.msra.mxu0 0.0
  %1056 = vmatprep.subr.mxu0 0.0
  %1057 = vmatpush1.msra.mxu0 0.0
  %1058 = vmatprep.subr.mxu0 0.0
  %1059 = vmatpush1.msra.mxu0 0.0
  %1060 = vmatprep.subr.mxu0 0.0
  %1061 = vmatpush1.msra.mxu0 0.0
  %1062 = vmatprep.subr.mxu0 0.0
  %1063 = vmatpush1.msra.mxu0 0.0
  %1064 = vmatprep.subr.mxu0 0.0
  %1065 = vmatpush1.msra.mxu0 0.0
  %1066 = vmatprep.subr.mxu0 0.0
  %1067 = vmatpush1.msra.mxu0 0.0
  %1068 = vmatprep.subr.mxu0 0.0
  %1069 = vmatpush1.msra.mxu0 0.0
  %1070 = vmatprep.subr.mxu0 0.0
  %1071 = vmatpush1.msra.mxu0 0.0
  %1072 = vmatprep.subr.mxu0 0.0
  %1073 = vmatpush1.msra.mxu0 0.0
  %1074 = vmatprep.subr.mxu0 0.0
  %1075 = vmatpush1.msra.mxu0 0.0
  %1076 = vmatprep.subr.mxu0 0.0
  %1077 = vmatpush1.msra.mxu0 0.0
  %1078 = vmatprep.subr.mxu0 0.0
  %1079 = vmatpush1.msra.mxu0 0.0
  %1080 = vmatprep.subr.mxu0 0.0
  %1081 = vmatpush1.msra.mxu0 0.0
  %1082 = vmatprep.mubr.f32.mxu0 0.0
  %1083 = vmatmul.mubr.f32.gmra.mrb[0].mxu0 %v1016
  %v1084 = vpop.f32.mrb[0].mxu0
  %v1085 = vadd.f32 0.0, %v1084
  %v1086 = vpop.f32.mrb[0].mxu0
  %1087 = vdwg.mxu0
  %v1088 = vld [vmem:[%s8] sm:$0xff]
  %v1089 = vld [vmem:[%s8 + $0x8] sm:$0xff]
  %v1090 = vld [vmem:[%s8 + $0x10] sm:$0xff]
  %v1091 = vld [vmem:[%s8 + $0x18] sm:$0xff]
  %v1092 = vld [vmem:[%s8 + $0x20] sm:$0xff]
  %v1093 = vld [vmem:[%s8 + $0x28] sm:$0xff]
  %v1094 = vld [vmem:[%s8 + $0x30] sm:$0xff]
  %v1095 = vld [vmem:[%s8 + $0x38] sm:$0xff]
  %v1096 = vld [vmem:[%s8 + $0x40] sm:$0xff]
  %v1097 = vld [vmem:[%s8 + $0x48] sm:$0xff]
  %v1098 = vld [vmem:[%s8 + $0x50] sm:$0xff]
  %v1099 = vld [vmem:[%s8 + $0x58] sm:$0xff]
  %v1100 = vld [vmem:[%s8 + $0x60] sm:$0xff]
  %v1101 = vld [vmem:[%s8 + $0x68] sm:$0xff]
  %v1102 = vld [vmem:[%s8 + $0x70] sm:$0xff]
  %v1103 = vld [vmem:[%s8 + $0x78] sm:$0xff]
  %v1104 = vld [vmem:[%s9] sm:$0x1]
  %v1106 = vlaneseq
  %v1107 = vshrl.u32 %v1106, 7
  %v1108 = vsub.s32 0, %v1107
  %v1109 = vrot.slane %v1104, %v1108
  %1111 = vmatprep.subr.mxu0 0.0
  %1112 = vmatpush1.msra.mxu0 %v1088
  %1113 = vmatprep.subr.mxu0 0.0
  %1114 = vmatpush1.msra.mxu0 %v1089
  %1115 = vmatprep.subr.mxu0 0.0
  %1116 = vmatpush1.msra.mxu0 %v1090
  %1117 = vmatprep.subr.mxu0 0.0
  %1118 = vmatpush1.msra.mxu0 %v1091
  %1119 = vmatprep.subr.mxu0 0.0
  %1120 = vmatpush1.msra.mxu0 %v1092
  %1121 = vmatprep.subr.mxu0 0.0
  %1122 = vmatpush1.msra.mxu0 %v1093
  %1123 = vmatprep.subr.mxu0 0.0
  %1124 = vmatpush1.msra.mxu0 %v1094
  %1125 = vmatprep.subr.mxu0 0.0
  %1126 = vmatpush1.msra.mxu0 %v1095
  %1127 = vmatprep.subr.mxu0 0.0
  %1128 = vmatpush1.msra.mxu0 %v1096
  %1129 = vmatprep.subr.mxu0 0.0
  %1130 = vmatpush1.msra.mxu0 %v1097
  %1131 = vmatprep.subr.mxu0 0.0
  %1132 = vmatpush1.msra.mxu0 %v1098
  %1133 = vmatprep.subr.mxu0 0.0
  %1134 = vmatpush1.msra.mxu0 %v1099
  %1135 = vmatprep.subr.mxu0 0.0
  %1136 = vmatpush1.msra.mxu0 %v1100
  %1137 = vmatprep.subr.mxu0 0.0
  %1138 = vmatpush1.msra.mxu0 %v1101
  %1139 = vmatprep.subr.mxu0 0.0
  %1140 = vmatpush1.msra.mxu0 %v1102
  %1141 = vmatprep.subr.mxu0 0.0
  %1142 = vmatpush1.msra.mxu0 %v1103
  %1143 = vmatprep.subr.mxu0 0.0
  %1144 = vmatpush1.msra.mxu0 0.0
  %1145 = vmatprep.subr.mxu0 0.0
  %1146 = vmatpush1.msra.mxu0 0.0
  %1147 = vmatprep.subr.mxu0 0.0
  %1148 = vmatpush1.msra.mxu0 0.0
  %1149 = vmatprep.subr.mxu0 0.0
  %1150 = vmatpush1.msra.mxu0 0.0
  %1151 = vmatprep.subr.mxu0 0.0
  %1152 = vmatpush1.msra.mxu0 0.0
  %1153 = vmatprep.subr.mxu0 0.0
  %1154 = vmatpush1.msra.mxu0 0.0
  %1155 = vmatprep.subr.mxu0 0.0
  %1156 = vmatpush1.msra.mxu0 0.0
  %1157 = vmatprep.subr.mxu0 0.0
  %1158 = vmatpush1.msra.mxu0 0.0
  %1159 = vmatprep.subr.mxu0 0.0
  %1160 = vmatpush1.msra.mxu0 0.0
  %1161 = vmatprep.subr.mxu0 0.0
  %1162 = vmatpush1.msra.mxu0 0.0
  %1163 = vmatprep.subr.mxu0 0.0
  %1164 = vmatpush1.msra.mxu0 0.0
  %1165 = vmatprep.subr.mxu0 0.0
  %1166 = vmatpush1.msra.mxu0 0.0
  %1167 = vmatprep.subr.mxu0 0.0
  %1168 = vmatpush1.msra.mxu0 0.0
  %1169 = vmatprep.subr.mxu0 0.0
  %1170 = vmatpush1.msra.mxu0 0.0
  %1171 = vmatprep.subr.mxu0 0.0
  %1172 = vmatpush1.msra.mxu0 0.0
  %1173 = vmatprep.subr.mxu0 0.0
  %1174 = vmatpush1.msra.mxu0 0.0
  %1175 = vmatprep.mubr.f32.mxu0 0.0
  %1176 = vmatmul.mubr.f32.gmra.mrb[0].mxu0 %v1085
  %v1177 = vpop.f32.mrb[0].mxu0
  %v1178 = vadd.f32 %v1109, %v1177
  %v1179 = vpop.f32.mrb[0].mxu0
  %1180 = vdwg.mxu0
  %1181 = vst [vmem:[%s10] sm:$0xff] %v1178
  // Predicated region
  $region42: #{gnn_forward.1} parent=0 // pred_check
    _
  $region43: #{gnn_forward.1} parent=0 // pred_check_branch
    %1183 = sbr.rel (0) target = $region45
  $region44: #{gnn_forward.1} parent=0 // pred_region
    _
  $region45: #{gnn_forward.1} parent=0 // pred_fallthru
    _
  // Predicated region
  $region46: #{gnn_forward.1} parent=0 // pred_check
    _
  $region47: #{gnn_forward.1} parent=0 // pred_check_branch
    %1185 = sbr.rel (0) target = $region49
  $region48: #{gnn_forward.1} parent=0 // pred_region
    _
  $region49: #{gnn_forward.1} parent=0 // pred_fallthru
    _

</llo_original>
